<compile_context>
chip_gen: v5e
topology: v5e:2x2
jax: 0.10.0
libtpu: 0.0.40
codegen_flags: <defaults>
</compile_context>

<pallas_src>
import functools

import jax
import jax.numpy as jnp
from jax.experimental import pallas as pl
from jax.experimental.pallas import tpu as pltpu

LN_EPS = 1e-5  # PyTorch nn.LayerNorm default


def _round_up(x, m):
    return (x + m - 1) // m * m


@functools.lru_cache(maxsize=1)
def _vmem_capacity():
    """Per-core VMEM capacity in bytes (generation-aware), conservative fallback."""
    try:
        cap = int(getattr(pltpu.get_tpu_info(), "vmem_capacity_bytes", 0))
        if cap > 0:
            return cap
    except Exception:  # query unavailable -> assume the smallest generation (v7x, 64 MiB)
        pass
    return 64 << 20


def _const_spec(shape, index_map):
    """BlockSpec for a grid-invariant operand; request single-buffering when available.

    VMEM budgeting elsewhere assumes worst-case double buffering, so falling back to a
    plain (double-buffered) BlockSpec can never push the kernel over its VMEM limit.
    """
    if hasattr(pl, "Buffered"):
        try:
            return pl.BlockSpec(shape, index_map, pipeline_mode=pl.Buffered(1))
        except TypeError:  # older BlockSpec signature without pipeline_mode
            pass
    return pl.BlockSpec(shape, index_map)


def _layer_norm(y, gamma, beta):
    mean = jnp.mean(y, axis=-1, keepdims=True)
    cent = y - mean
    var = jnp.mean(cent * cent, axis=-1, keepdims=True)
    return cent * jax.lax.rsqrt(var + LN_EPS) * gamma + beta


def _mask_rows_to_zero(x, block_rows, n_valid_rows):
    rid = pl.program_id(0) * block_rows + jax.lax.broadcasted_iota(jnp.int32, x.shape, 0)
    return jnp.where(rid < n_valid_rows, x, jnp.zeros_like(x))


def _ffn_kernel(x_ref, w1_ref, b1_ref, w2_ref, b2_ref, gamma_ref, beta_ref, o_ref, *,
                n_valid_rows, block_rows, mask_rows):
    # x_ref: (tm, d_in) tile of rows in the input dtype (bf16 keeps the MXU fast).
    x = x_ref[...]
    if mask_rows:
        # Last row-block may extend past B*L: zero the out-of-range rows so garbage VMEM
        # never feeds the MXU (their outputs are masked on the store anyway).
        x = _mask_rows_to_zero(x, block_rows, n_valid_rows)

    # w_1 (1x1 conv == linear, d_in -> d_hid): MXU in the input dtype with f32
    # accumulation; bias + ReLU + downcast fused into one expression.
    h = jnp.maximum(
        jnp.dot(x, w1_ref[...], preferred_element_type=jnp.float32) + b1_ref[...],
        0.0).astype(w2_ref.dtype)

    # w_2 (d_hid -> d_in); dropout (eval mode) is identity; residual add in f32.
    y = jnp.dot(h, w2_ref[...], preferred_element_type=jnp.float32)
    y = y + b2_ref[...] + x.astype(jnp.float32)

    o_ref[...] = _layer_norm(y, gamma_ref[...], beta_ref[...]).astype(o_ref.dtype)


def _ffn_kernel_split(x_ref, w1_ref, b1_ref, w2_ref, b2_ref, gamma_ref, beta_ref, o_ref,
                      acc_ref, *, n_valid_rows, block_rows, mask_rows):
    # Inner "arbitrary" axis over d_hid chunks; (tm, d_in) f32 accumulator in VMEM.
    k = pl.program_id(1)

    @pl.when(k == 0)
    def _():
        acc_ref[...] = jnp.zeros_like(acc_ref)

    x = x_ref[...]
    if mask_rows:
        x = _mask_rows_to_zero(x, block_rows, n_valid_rows)

    h = jnp.maximum(
        jnp.dot(x, w1_ref[...], preferred_element_type=jnp.float32) + b1_ref[...],
        0.0).astype(w2_ref.dtype)
    acc_ref[...] += jnp.dot(h, w2_ref[...], preferred_element_type=jnp.float32)

    @pl.when(k == pl.num_programs(1) - 1)
    def _():
        y = acc_ref[...] + b2_ref[...] + x.astype(jnp.float32)
        o_ref[...] = _layer_norm(y, gamma_ref[...], beta_ref[...]).astype(o_ref.dtype)


@functools.partial(jax.jit,
                   static_argnames=("block_rows", "hidden_block", "force_hidden_split"))
def positionwise_ffn(x, w1, b1, w2, b2, gamma, beta, *,
                     block_rows=None, hidden_block=None, force_hidden_split=False):
    """x: (B, L, d_in). w1: (d_in, d_hid), w2: (d_hid, d_in). Returns (B, L, d_in).

    w1/w2 are the matmul-layout equivalents of the PyTorch Conv1d(k=1) weights:
    W1_mat[i, o] == conv1_w[o, i, 0], W2_mat[i, o] == conv2_w[o, i, 0].
    """
    B, L, d_in = x.shape
    d_hid = w1.shape[1]
    n_rows = B * L
    act_bytes = x.dtype.itemsize
    w_bytes = w1.dtype.itemsize

    cap = _vmem_capacity()
    budget = (cap * 3) // 4  # headroom below per-generation VMEM capacity

    # --- row tile -------------------------------------------------------------------
    row_align = 8 if act_bytes >= 4 else (16 if act_bytes == 2 else 32)
    if block_rows is None:
        tm_pref = 512 if cap >= (96 << 20) else 256  # v5e/v6e (128 MiB VMEM) -> bigger tile
        # Keep >= 2 row steps when possible so the "parallel" axis spans both v7x TCs.
        tm = min(tm_pref, max(row_align, _round_up(pl.cdiv(n_rows, 2), row_align)))
    else:
        tm = max(row_align, _round_up(block_rows, row_align))
    tm = min(tm, _round_up(n_rows, row_align))
    n_row_blocks = pl.cdiv(n_rows, tm)
    mask_rows = (n_rows % tm) != 0

    # --- VMEM estimates (weights counted double-buffered = worst case) ---------------
    def resident_est(tm_):
        return (4 * tm_ * d_in * act_bytes            # x + out tiles (double-buffered)
                + 2 * 2 * d_in * d_hid * w_bytes      # W1 + W2
                + tm_ * d_hid * (4 + w_bytes)         # hidden activation (f32 + cast)
                + 4 * tm_ * d_in * 4                  # f32 epilogue temporaries
                + 2 * (d_hid + 3 * d_in) * 4)

    def split_est(tm_, tk_):
        return (4 * tm_ * d_in * act_bytes
                + 2 * 2 * d_in * tk_ * w_bytes        # W1/W2 chunks (double-buffered)
                + tm_ * tk_ * (4 + w_bytes)
                + tm_ * d_in * 4                      # f32 accumulator scratch
                + 4 * tm_ * d_in * 4
                + 2 * (2 * tk_ + 3 * d_in) * 4)

    # --- hidden-dim split decision ----------------------------------------------------
    split = bool(force_hidden_split) or resident_est(tm) > budget \
        or (d_hid >= 2048 and cap <= (64 << 20))
    tk = None
    if split:
        divisors = [t for t in range(128, d_hid + 1, 128) if d_hid % t == 0]
        if hidden_block is not None and hidden_block in divisors:
            tk = hidden_block
        elif divisors:
            for t in reversed(divisors):              # largest chunk that fits the budget
                if split_est(tm, t) <= budget:
                    tk = t
                    break
            if tk is None:
                tk = divisors[0]
        if tk is None or tk == d_hid:
            split = False
            tk = None

    est = split_est(tm, tk) if split else resident_est(tm)
    # Never lie to the compiler: the limit is >= the estimated requirement, capped only
    # slightly below physical per-generation capacity.
    vmem_limit = max(int(1.25 * est) + (2 << 20), 32 << 20, est)
    vmem_limit = int(min(vmem_limit, cap - (2 << 20)))

    # --- operands ----------------------------------------------------------------------
    x2 = x.reshape(n_rows, d_in)
    f32 = jnp.float32
    b1_2 = b1.astype(f32).reshape(1, d_hid)
    b2_2 = b2.astype(f32).reshape(1, d_in)
    gamma_2 = gamma.astype(f32).reshape(1, d_in)
    beta_2 = beta.astype(f32).reshape(1, d_in)

    cost = pl.CostEstimate(
        flops=4 * n_rows * d_in * d_hid + 10 * n_rows * d_in,
        transcendentals=n_rows,
        bytes_accessed=2 * n_rows * d_in * act_bytes + 2 * d_in * d_hid * w_bytes,
    )

    if split:
        kernel = functools.partial(_ffn_kernel_split, n_valid_rows=n_rows,
                                   block_rows=tm, mask_rows=mask_rows)
        grid = (n_row_blocks, d_hid // tk)
        in_specs = [
            pl.BlockSpec((tm, d_in), lambda i, k: (i, 0)),    # x rows (resident over k)
            pl.BlockSpec((d_in, tk), lambda i, k: (0, k)),    # W1 chunk
            pl.BlockSpec((1, tk), lambda i, k: (0, k)),       # b1 chunk
            pl.BlockSpec((tk, d_in), lambda i, k: (k, 0)),    # W2 chunk
            _const_spec((1, d_in), lambda i, k: (0, 0)),      # b2
            _const_spec((1, d_in), lambda i, k: (0, 0)),      # gamma
            _const_spec((1, d_in), lambda i, k: (0, 0)),      # beta
        ]
        out_spec = pl.BlockSpec((tm, d_in), lambda i, k: (i, 0))
        scratch = [pltpu.VMEM((tm, d_in), jnp.float32)]
        dims = ("parallel", "arbitrary")
    else:
        kernel = functools.partial(_ffn_kernel, n_valid_rows=n_rows,
                                   block_rows=tm, mask_rows=mask_rows)
        grid = (n_row_blocks,)
        in_specs = [
            pl.BlockSpec((tm, d_in), lambda i: (i, 0)),       # x rows (streamed)
            _const_spec((d_in, d_hid), lambda i: (0, 0)),     # W1 (resident)
            _const_spec((1, d_hid), lambda i: (0, 0)),        # b1
            _const_spec((d_hid, d_in), lambda i: (0, 0)),     # W2 (resident)
            _const_spec((1, d_in), lambda i: (0, 0)),         # b2
            _const_spec((1, d_in), lambda i: (0, 0)),         # gamma
            _const_spec((1, d_in), lambda i: (0, 0)),         # beta
        ]
        out_spec = pl.BlockSpec((tm, d_in), lambda i: (i, 0))
        scratch = []
        dims = ("parallel",)

    out = pl.pallas_call(
        kernel,
        out_shape=jax.ShapeDtypeStruct((n_rows, d_in), x.dtype),
        grid_spec=pltpu.PrefetchScalarGridSpec(
            num_scalar_prefetch=0,
            grid=grid,
            in_specs=in_specs,
            out_specs=out_spec,
            scratch_shapes=scratch,
        ),
        compiler_params=pltpu.CompilerParams(
            dimension_semantics=dims,
            vmem_limit_bytes=vmem_limit,
        ),
        cost_estimate=cost,
    )(x2, w1, b1_2, w2, b2_2, gamma_2, beta_2)

    return out.reshape(B, L, d_in)


def _reference(x, w1, b1, w2, b2, gamma, beta):
    """Pure-JAX f32 reference matching the PyTorch forward (dropout in eval mode)."""
    xf = x.astype(jnp.float32)
    h = jnp.maximum(
        jnp.einsum("bld,dh->blh", xf, w1.astype(jnp.float32)) + b1.astype(jnp.float32),
        0.0)
    y = jnp.einsum("blh,hd->bld", h, w2.astype(jnp.float32)) + b2.astype(jnp.float32)
    y = y + xf
    mean = jnp.mean(y, axis=-1, keepdims=True)
    var = jnp.mean((y - mean) ** 2, axis=-1, keepdims=True)
    return (y - mean) / jnp.sqrt(var + LN_EPS) * gamma.astype(jnp.float32) \
        + beta.astype(jnp.float32)


if __name__ == "__main__":
    key = jax.random.PRNGKey(0)
    kx, k1, kb1, k2, kb2 = jax.random.split(key, 5)

    # Shared parameters (lane-dense d_model = multiple of 128).
    d_in, d_hid = 256, 512
    # Conv1d(d_in, d_hid, 1) weight is (d_hid, d_in, 1) in PyTorch; we store the
    # equivalent matmul weight (d_in, d_hid).
    w1 = jax.random.normal(k1, (d_in, d_hid), dtype=jnp.float32) * 0.05
    b1 = jax.random.normal(kb1, (d_hid,), dtype=jnp.float32) * 0.05
    w2 = jax.random.normal(k2, (d_hid, d_in), dtype=jnp.float32) * 0.05
    b2 = jax.random.normal(kb2, (d_in,), dtype=jnp.float32) * 0.05
    gamma = jnp.ones((d_in,), dtype=jnp.float32)   # LayerNorm weight init
    beta = jnp.zeros((d_in,), dtype=jnp.float32)   # LayerNorm bias init

    # 1) bf16 path, resident weights, divisible row count (MXU-friendly demo).
    B, L = 2, 64
    x = jax.random.normal(kx, (B, L, d_in), dtype=jnp.float32)
    xb = x.astype(jnp.bfloat16)
    w1b, w2b = w1.astype(jnp.bfloat16), w2.astype(jnp.bfloat16)
    out_bf16 = jax.block_until_ready(
        positionwise_ffn(xb, w1b, b1, w2b, b2, gamma, beta))
    ref_bf16 = _reference(xb, w1b, b1, w2b, b2, gamma, beta)
    assert out_bf16.shape == (B, L, d_in)
    assert jnp.allclose(out_bf16.astype(jnp.float32), ref_bf16, atol=5e-2, rtol=5e-2), \
        "bf16 resident path mismatch vs reference"

    # 2) bf16 path with a forced hidden-dim split (4 k-steps) and a ragged row count:
    #    exercises the f32 accumulator + pl.when init/finalize and in-kernel row masking.
    Lr = 63
    xr = xb[:, :Lr, :]
    out_split = jax.block_until_ready(
        positionwise_ffn(xr, w1b, b1, w2b, b2, gamma, beta,
                         force_hidden_split=True, hidden_block=128))
    ref_split = _reference(xr, w1b, b1, w2b, b2, gamma, beta)
    assert out_split.shape == (B, Lr, d_in)
    assert jnp.allclose(out_split.astype(jnp.float32), ref_split, atol=5e-2, rtol=5e-2), \
        "bf16 split path mismatch vs reference"

    # 3) f32 path at a small ragged shape (partial last row-block, tight numerics).
    Bs, Ls, ds_in, ds_hid = 2, 7, 128, 256
    xs = x[:, :Ls, :ds_in].astype(jnp.float32)
    out_f32 = jax.block_until_ready(
        positionwise_ffn(xs, w1[:ds_in, :ds_hid], b1[:ds_hid],
                         w2[:ds_hid, :ds_in], b2[:ds_in],
                         gamma[:ds_in], beta[:ds_in]))
    ref_f32 = _reference(xs, w1[:ds_in, :ds_hid], b1[:ds_hid],
                         w2[:ds_hid, :ds_in], b2[:ds_in],
                         gamma[:ds_in], beta[:ds_in])
    assert out_f32.shape == (Bs, Ls, ds_in)
    assert jnp.allclose(out_f32, ref_f32, atol=2e-3, rtol=2e-3), \
        "f32 path mismatch vs reference"

    # TODO(synk): training-mode dropout (Bernoulli mask via pltpu.prng_*) not wired in;
    # forward matches the module in eval() mode where dropout is identity.
    print("KERNEL_OK")
</pallas_src>

<mosaic_0001>
module attributes {stable_mosaic.version = 11 : i64} {
  func.func @_ffn_kernel(%arg0: i32, %arg1: memref<64x256xbf16, #tpu.memory_space<vmem>>, %arg2: memref<256x512xbf16, #tpu.memory_space<vmem>>, %arg3: memref<1x512xf32, #tpu.memory_space<vmem>>, %arg4: memref<512x256xbf16, #tpu.memory_space<vmem>>, %arg5: memref<1x256xf32, #tpu.memory_space<vmem>>, %arg6: memref<1x256xf32, #tpu.memory_space<vmem>>, %arg7: memref<1x256xf32, #tpu.memory_space<vmem>>, %arg8: memref<64x256xbf16, #tpu.memory_space<vmem>>) attributes {dimension_semantics = [#tpu.dimension_semantics<parallel>], iteration_bounds = array<i64: 2>, scalar_prefetch = 0 : i64, scratch_operands = 0 : i64, tpu.core_type = #tpu.core_type<tc>, window_params = [{transform_indices = @transform_0, window_bounds = array<i64: 64, 256>}, {pipeline_mode = #tpu.pipeline_mode<synchronous>, transform_indices = @transform_1, window_bounds = array<i64: 256, 512>}, {pipeline_mode = #tpu.pipeline_mode<synchronous>, transform_indices = @transform_2, window_bounds = array<i64: 1, 512>}, {pipeline_mode = #tpu.pipeline_mode<synchronous>, transform_indices = @transform_3, window_bounds = array<i64: 512, 256>}, {pipeline_mode = #tpu.pipeline_mode<synchronous>, transform_indices = @transform_4, window_bounds = array<i64: 1, 256>}, {pipeline_mode = #tpu.pipeline_mode<synchronous>, transform_indices = @transform_5, window_bounds = array<i64: 1, 256>}, {pipeline_mode = #tpu.pipeline_mode<synchronous>, transform_indices = @transform_6, window_bounds = array<i64: 1, 256>}, {transform_indices = @transform_7, window_bounds = array<i64: 64, 256>}]} {
    %c0 = arith.constant 0 : index
    %c0_0 = arith.constant 0 : index
    %0 = vector.load %arg1[%c0, %c0_0] : memref<64x256xbf16, #tpu.memory_space<vmem>>, vector<64x256xbf16>
    %c0_1 = arith.constant 0 : index
    %c0_2 = arith.constant 0 : index
    %1 = vector.load %arg2[%c0_1, %c0_2] : memref<256x512xbf16, #tpu.memory_space<vmem>>, vector<256x512xbf16>
    %cst = arith.constant dense<0.000000e+00> : vector<64x512xf32>
    %2 = tpu.matmul %0, %1, %cst {dimension_numbers = #tpu.dot_dimension_numbers<[1], [0], [0], [1], [0, 0, 1, 1], [], []>} : vector<64x256xbf16>, vector<256x512xbf16>, vector<64x512xf32> -> vector<64x512xf32>
    %c0_3 = arith.constant 0 : index
    %c0_4 = arith.constant 0 : index
    %3 = vector.load %arg3[%c0_3, %c0_4] : memref<1x512xf32, #tpu.memory_space<vmem>>, vector<1x512xf32>
    %4 = vector.broadcast %3 : vector<1x512xf32> to vector<64x512xf32>
    %5 = arith.addf %2, %4 : vector<64x512xf32>
    %cst_5 = arith.constant 0.000000e+00 : f32
    %6 = vector.broadcast %cst_5 : f32 to vector<64x512xf32>
    %7 = arith.maximumf %5, %6 : vector<64x512xf32>
    %8 = arith.truncf %7 : vector<64x512xf32> to vector<64x512xbf16>
    %c0_6 = arith.constant 0 : index
    %c0_7 = arith.constant 0 : index
    %9 = vector.load %arg4[%c0_6, %c0_7] : memref<512x256xbf16, #tpu.memory_space<vmem>>, vector<512x256xbf16>
    %cst_8 = arith.constant dense<0.000000e+00> : vector<64x256xf32>
    %10 = tpu.matmul %8, %9, %cst_8 {dimension_numbers = #tpu.dot_dimension_numbers<[1], [0], [0], [1], [0, 0, 1, 1], [], []>} : vector<64x512xbf16>, vector<512x256xbf16>, vector<64x256xf32> -> vector<64x256xf32>
    %c0_9 = arith.constant 0 : index
    %c0_10 = arith.constant 0 : index
    %11 = vector.load %arg5[%c0_9, %c0_10] : memref<1x256xf32, #tpu.memory_space<vmem>>, vector<1x256xf32>
    %12 = vector.broadcast %11 : vector<1x256xf32> to vector<64x256xf32>
    %13 = arith.addf %10, %12 : vector<64x256xf32>
    %14 = arith.extf %0 : vector<64x256xbf16> to vector<64x256xf32>
    %15 = arith.addf %13, %14 : vector<64x256xf32>
    %c0_11 = arith.constant 0 : index
    %c0_12 = arith.constant 0 : index
    %16 = vector.load %arg6[%c0_11, %c0_12] : memref<1x256xf32, #tpu.memory_space<vmem>>, vector<1x256xf32>
    %c0_13 = arith.constant 0 : index
    %c0_14 = arith.constant 0 : index
    %17 = vector.load %arg7[%c0_13, %c0_14] : memref<1x256xf32, #tpu.memory_space<vmem>>, vector<1x256xf32>
    %cst_15 = arith.constant dense<0.000000e+00> : vector<64xf32>
    %18 = vector.multi_reduction <add>, %15, %cst_15 [1] : vector<64x256xf32> to vector<64xf32>
    %19 = vector.shape_cast %18 : vector<64xf32> to vector<64x1xf32>
    %cst_16 = arith.constant 2.560000e+02 : f32
    %20 = vector.broadcast %cst_16 : f32 to vector<64x1xf32>
    %21 = arith.divf %19, %20 : vector<64x1xf32>
    %22 = vector.broadcast %21 : vector<64x1xf32> to vector<64x256xf32>
    %23 = arith.subf %15, %22 : vector<64x256xf32>
    %24 = arith.mulf %23, %23 : vector<64x256xf32>
    %cst_17 = arith.constant dense<0.000000e+00> : vector<64xf32>
    %25 = vector.multi_reduction <add>, %24, %cst_17 [1] : vector<64x256xf32> to vector<64xf32>
    %26 = vector.shape_cast %25 : vector<64xf32> to vector<64x1xf32>
    %cst_18 = arith.constant 2.560000e+02 : f32
    %27 = vector.broadcast %cst_18 : f32 to vector<64x1xf32>
    %28 = arith.divf %26, %27 : vector<64x1xf32>
    %cst_19 = arith.constant 9.99999974E-6 : f32
    %29 = vector.broadcast %cst_19 : f32 to vector<64x1xf32>
    %30 = arith.addf %28, %29 : vector<64x1xf32>
    %31 = math.rsqrt %30 : vector<64x1xf32>
    %32 = vector.broadcast %31 : vector<64x1xf32> to vector<64x256xf32>
    %33 = arith.mulf %23, %32 : vector<64x256xf32>
    %34 = vector.broadcast %16 : vector<1x256xf32> to vector<64x256xf32>
    %35 = arith.mulf %33, %34 : vector<64x256xf32>
    %36 = vector.broadcast %17 : vector<1x256xf32> to vector<64x256xf32>
    %37 = arith.addf %35, %36 : vector<64x256xf32>
    %38 = arith.truncf %37 : vector<64x256xf32> to vector<64x256xbf16>
    %c0_20 = arith.constant 0 : index
    %c0_21 = arith.constant 0 : index
    %39 = vector.load %arg8[%c0_20, %c0_21] : memref<64x256xbf16, #tpu.memory_space<vmem>>, vector<64x256xbf16>
    tpu.vector_store %arg8[%c0_20, %c0_21], %38 {strides = array<i32>} : memref<64x256xbf16, #tpu.memory_space<vmem>>, vector<64x256xbf16>,
    return
  }
  func.func @transform_0(%arg0: i32) -> (i32, i32) {
    %c0_i32 = arith.constant 0 : i32
    %c0_i32_0 = arith.constant 0 : i32
    return %arg0, %c0_i32 : i32, i32
  }
  func.func @transform_1(%arg0: i32) -> (i32, i32) {
    %c0_i32 = arith.constant 0 : i32
    %c0_i32_0 = arith.constant 0 : i32
    %c0_i32_1 = arith.constant 0 : i32
    return %c0_i32, %c0_i32_0 : i32, i32
  }
  func.func @transform_2(%arg0: i32) -> (i32, i32) {
    %c0_i32 = arith.constant 0 : i32
    %c0_i32_0 = arith.constant 0 : i32
    %c0_i32_1 = arith.constant 0 : i32
    return %c0_i32, %c0_i32_0 : i32, i32
  }
  func.func @transform_3(%arg0: i32) -> (i32, i32) {
    %c0_i32 = arith.constant 0 : i32
    %c0_i32_0 = arith.constant 0 : i32
    %c0_i32_1 = arith.constant 0 : i32
    return %c0_i32, %c0_i32_0 : i32, i32
  }
  func.func @transform_4(%arg0: i32) -> (i32, i32) {
    %c0_i32 = arith.constant 0 : i32
    %c0_i32_0 = arith.constant 0 : i32
    %c0_i32_1 = arith.constant 0 : i32
    return %c0_i32, %c0_i32_0 : i32, i32
  }
  func.func @transform_5(%arg0: i32) -> (i32, i32) {
    %c0_i32 = arith.constant 0 : i32
    %c0_i32_0 = arith.constant 0 : i32
    %c0_i32_1 = arith.constant 0 : i32
    return %c0_i32, %c0_i32_0 : i32, i32
  }
  func.func @transform_6(%arg0: i32) -> (i32, i32) {
    %c0_i32 = arith.constant 0 : i32
    %c0_i32_0 = arith.constant 0 : i32
    %c0_i32_1 = arith.constant 0 : i32
    return %c0_i32, %c0_i32_0 : i32, i32
  }
  func.func @transform_7(%arg0: i32) -> (i32, i32) {
    %c0_i32 = arith.constant 0 : i32
    %c0_i32_0 = arith.constant 0 : i32
    return %arg0, %c0_i32 : i32, i32
  }
}

</mosaic_0001>

<llo_original>
// kernel: positionwise_ffn.1
$region0: #{positionwise_ffn.1}
  #allocation0 [shape = 'u32[]', space=smem, size = 0x4, offset = 0x4, fixed_abs, tag = 'smem constant byte address 0x4 - core index']
  #allocation1 [shape = 'u32[72,128]{1,0:T(1,128)}', space=vmem, size = 0x9000, scoped, tag = 'internal scratch']
  %s0 = inlined_call_operand.hbm [shape: bf16[128,256], index: 0, kind: input, shape index: {}]
  %s1 = inlined_call_operand.hbm [shape: bf16[256,512], index: 1, kind: input, shape index: {}]
  %s2 = inlined_call_operand.vmem [shape: f32[1,512], index: 2, kind: input, shape index: {}]
  %s3 = inlined_call_operand.hbm [shape: bf16[512,256], index: 3, kind: input, shape index: {}]
  %s4 = inlined_call_operand.vmem [shape: f32[1,256], index: 4, kind: input, shape index: {}]
  %s5 = inlined_call_operand.vmem [shape: f32[1,256], index: 5, kind: input, shape index: {}]
  %s6 = inlined_call_operand.vmem [shape: f32[1,256], index: 6, kind: input, shape index: {}]
  %s7 = inlined_call_operand.hbm [shape: bf16[128,256], index: 7, kind: output, shape index: {}]
  %s8 = sld [smem:[#allocation0]]
  $region73: #{positionwise_ffn.1} parent=0
    _
  %s10 = ssub.s32 1, %s8
  %s11 = scalar_select 0, %s10, %s8
  $region1: #{positionwise_ffn.1} parent=0
    #allocation2 [shape = 'u8[65536]{0}', space=vmem, size = 0x10000, scoped, tag = 'input window, operand 0']
    #allocation3 [shape = 's32[2]{0}', space=sflag, size = 0x8, scoped, tag = 'scoped memory for positionwise_ffn.1']
    #allocation4 [shape = 's32[2]{0}', space=sflag, size = 0x8, scoped, tag = 'scoped memory for positionwise_ffn.1']
    #allocation5 [shape = 'u8[262144]{0}', space=vmem, size = 0x40000, scoped, tag = 'input window, operand 1, single buffered']
    #allocation6 [shape = 's32[1]{0}', space=sflag, size = 0x4, scoped, tag = 'scoped memory for positionwise_ffn.1']
    #allocation7 [shape = 'u8[262144]{0}', space=vmem, size = 0x40000, scoped, tag = 'input window, operand 3, single buffered']
    #allocation8 [shape = 'u8[65536]{0}', space=vmem, size = 0x10000, scoped, tag = 'output window, operand 0']
    %12 = vsyncpa [#allocation3], 0
    %s13 = scalar_lea.sflag [#allocation3], 1
    %14 = vsyncpa %s13, 0
    %15 = vsyncpa [#allocation6], 0
    %16 = vsyncpa [#allocation4], 0
    %s17 = scalar_lea.sflag [#allocation4], 1
    %18 = vsyncpa %s17, 0
    loop: start=0, step=1, limit=4
    $region2: #{positionwise_ffn.1} parent=1 // loop_pre_header
      _
    $region3: #{positionwise_ffn.1} parent=1 // loop_header
      %s20 = sphi 0, %s24
      %p21 = scmp.ge.s32.totalorder %s20, 4
      %s30 = sphi 0, %s32
      %s33 = sphi 0, %s30
      %s34 = sphi 0, %s33
      %s50 = sphi 0, %s34
      %s54 = sphi 0, %s54
      %s56 = sphi 0, %s54
      %s57 = sphi 0, %s56
      %s71 = sphi 0, %s57
      %s75 = sphi 0, %s75
      %s77 = sphi 0, %s75
      %s78 = sphi 0, %s77
      %s92 = sphi 0, %s78
      %s96 = sphi 0, %s96
      %s98 = sphi 0, %s96
      %s99 = sphi 0, %s98
      %s113 = sphi 0, %s99
      %s117 = sphi 0, %s117
      %s119 = sphi 0, %s117
      %s120 = sphi 0, %s119
      %s134 = sphi 0, %s120
      %s138 = sphi 0, %s138
      %s140 = sphi 0, %s138
      %s141 = sphi 0, %s140
      %s155 = sphi 0, %s141
      %s159 = sphi 0, %s159
      %s161 = sphi 0, %s159
      %s162 = sphi 0, %s161
      %s176 = sphi 0, %s162
      %s182 = sphi 0, %s184
      %s185 = sphi 0, %s182
      %s186 = sphi 0, %s185
      %s202 = sphi 0, %s186
    $region4: #{positionwise_ffn.1} parent=1 // loop_header_branch
      %23 = sbr.rel (%p21) target = $region8
    $region5: #{positionwise_ffn.1} parent=1 // loop_body
      %s25 = ssub.s32 %s20, 1
      %s26 = ssub.s32 %s20, 2
      %s27 = sadd.s32 %s20, 1
      %s28 = ssub.s32 %s20, %s27
      %p29 = scmp.eq.s32.totalorder %s28, 0
      %s31 = sadd.s32 %s30, 1
      %s32 = scalar_select %p29, %s30, %s31
      %p35 = pneg %p29
      %p36 = scmp.eq.s32.totalorder %s20, 1
      %p37 = por %p35, %p36
      %p38 = scmp.ne.s32.totalorder %s30, %s33
      %p39 = scmp.eq.s32.totalorder %s20, 0
      %p40 = por %p38, %p39
      %p41 = scmp.ne.s32.totalorder %s30, %s33
      %p42 = scmp.eq.s32.totalorder %s25, 1
      %p43 = por %p41, %p42
      %p44 = scmp.ne.s32.totalorder %s33, %s34
      %p45 = scmp.eq.s32.totalorder %s25, 0
      %p46 = por %p44, %p45
      %p47 = scmp.ne.s32.totalorder %s33, %s34
      %p48 = scmp.eq.s32.totalorder %s26, 1
      %p49 = por %p47, %p48
      %p51 = scmp.ne.s32.totalorder %s34, %s50
      %p52 = scmp.eq.s32.totalorder %s26, 0
      %p53 = por %p51, %p52
      %s55 = sadd.s32 %s54, 1
      %p58 = scmp.eq.s32.totalorder %s20, 1
      %p59 = scmp.ne.s32.totalorder %s54, %s56
      %p60 = scmp.eq.s32.totalorder %s20, 0
      %p61 = por %p59, %p60
      %p62 = scmp.ne.s32.totalorder %s54, %s56
      %p63 = scmp.eq.s32.totalorder %s25, 1
      %p64 = por %p62, %p63
      %p65 = scmp.ne.s32.totalorder %s56, %s57
      %p66 = scmp.eq.s32.totalorder %s25, 0
      %p67 = por %p65, %p66
      %p68 = scmp.ne.s32.totalorder %s56, %s57
      %p69 = scmp.eq.s32.totalorder %s26, 1
      %p70 = por %p68, %p69
      %p72 = scmp.ne.s32.totalorder %s57, %s71
      %p73 = scmp.eq.s32.totalorder %s26, 0
      %p74 = por %p72, %p73
      %s76 = sadd.s32 %s75, 1
      %p79 = scmp.eq.s32.totalorder %s20, 1
      %p80 = scmp.ne.s32.totalorder %s75, %s77
      %p81 = scmp.eq.s32.totalorder %s20, 0
      %p82 = por %p80, %p81
      %p83 = scmp.ne.s32.totalorder %s75, %s77
      %p84 = scmp.eq.s32.totalorder %s25, 1
      %p85 = por %p83, %p84
      %p86 = scmp.ne.s32.totalorder %s77, %s78
      %p87 = scmp.eq.s32.totalorder %s25, 0
      %p88 = por %p86, %p87
      %p89 = scmp.ne.s32.totalorder %s77, %s78
      %p90 = scmp.eq.s32.totalorder %s26, 1
      %p91 = por %p89, %p90
      %p93 = scmp.ne.s32.totalorder %s78, %s92
      %p94 = scmp.eq.s32.totalorder %s26, 0
      %p95 = por %p93, %p94
      %s97 = sadd.s32 %s96, 1
      %p100 = scmp.eq.s32.totalorder %s20, 1
      %p101 = scmp.ne.s32.totalorder %s96, %s98
      %p102 = scmp.eq.s32.totalorder %s20, 0
      %p103 = por %p101, %p102
      %p104 = scmp.ne.s32.totalorder %s96, %s98
      %p105 = scmp.eq.s32.totalorder %s25, 1
      %p106 = por %p104, %p105
      %p107 = scmp.ne.s32.totalorder %s98, %s99
      %p108 = scmp.eq.s32.totalorder %s25, 0
      %p109 = por %p107, %p108
      %p110 = scmp.ne.s32.totalorder %s98, %s99
      %p111 = scmp.eq.s32.totalorder %s26, 1
      %p112 = por %p110, %p111
      %p114 = scmp.ne.s32.totalorder %s99, %s113
      %p115 = scmp.eq.s32.totalorder %s26, 0
      %p116 = por %p114, %p115
      %s118 = sadd.s32 %s117, 1
      %p121 = scmp.eq.s32.totalorder %s20, 1
      %p122 = scmp.ne.s32.totalorder %s117, %s119
      %p123 = scmp.eq.s32.totalorder %s20, 0
      %p124 = por %p122, %p123
      %p125 = scmp.ne.s32.totalorder %s117, %s119
      %p126 = scmp.eq.s32.totalorder %s25, 1
      %p127 = por %p125, %p126
      %p128 = scmp.ne.s32.totalorder %s119, %s120
      %p129 = scmp.eq.s32.totalorder %s25, 0
      %p130 = por %p128, %p129
      %p131 = scmp.ne.s32.totalorder %s119, %s120
      %p132 = scmp.eq.s32.totalorder %s26, 1
      %p133 = por %p131, %p132
      %p135 = scmp.ne.s32.totalorder %s120, %s134
      %p136 = scmp.eq.s32.totalorder %s26, 0
      %p137 = por %p135, %p136
      %s139 = sadd.s32 %s138, 1
      %p142 = scmp.eq.s32.totalorder %s20, 1
      %p143 = scmp.ne.s32.totalorder %s138, %s140
      %p144 = scmp.eq.s32.totalorder %s20, 0
      %p145 = por %p143, %p144
      %p146 = scmp.ne.s32.totalorder %s138, %s140
      %p147 = scmp.eq.s32.totalorder %s25, 1
      %p148 = por %p146, %p147
      %p149 = scmp.ne.s32.totalorder %s140, %s141
      %p150 = scmp.eq.s32.totalorder %s25, 0
      %p151 = por %p149, %p150
      %p152 = scmp.ne.s32.totalorder %s140, %s141
      %p153 = scmp.eq.s32.totalorder %s26, 1
      %p154 = por %p152, %p153
      %p156 = scmp.ne.s32.totalorder %s141, %s155
      %p157 = scmp.eq.s32.totalorder %s26, 0
      %p158 = por %p156, %p157
      %s160 = sadd.s32 %s159, 1
      %p163 = scmp.eq.s32.totalorder %s20, 1
      %p164 = scmp.ne.s32.totalorder %s159, %s161
      %p165 = scmp.eq.s32.totalorder %s20, 0
      %p166 = por %p164, %p165
      %p167 = scmp.ne.s32.totalorder %s159, %s161
      %p168 = scmp.eq.s32.totalorder %s25, 1
      %p169 = por %p167, %p168
      %p170 = scmp.ne.s32.totalorder %s161, %s162
      %p171 = scmp.eq.s32.totalorder %s25, 0
      %p172 = por %p170, %p171
      %p173 = scmp.ne.s32.totalorder %s161, %s162
      %p174 = scmp.eq.s32.totalorder %s26, 1
      %p175 = por %p173, %p174
      %p177 = scmp.ne.s32.totalorder %s162, %s176
      %p178 = scmp.eq.s32.totalorder %s26, 0
      %p179 = por %p177, %p178
      %s180 = ssub.s32 %s20, %s27
      %p181 = scmp.eq.s32.totalorder %s180, 0
      %s183 = sadd.s32 %s182, 1
      %s184 = scalar_select %p181, %s182, %s183
      %p187 = pneg %p181
      %p188 = scmp.eq.s32.totalorder %s20, 1
      %p189 = por %p187, %p188
      %p190 = scmp.ne.s32.totalorder %s182, %s185
      %p191 = scmp.eq.s32.totalorder %s20, 0
      %p192 = por %p190, %p191
      %p193 = scmp.ne.s32.totalorder %s182, %s185
      %p194 = scmp.eq.s32.totalorder %s25, 1
      %p195 = por %p193, %p194
      %p196 = scmp.ne.s32.totalorder %s185, %s186
      %p197 = scmp.eq.s32.totalorder %s25, 0
      %p198 = por %p196, %p197
      %p199 = scmp.ne.s32.totalorder %s185, %s186
      %p200 = scmp.eq.s32.totalorder %s26, 1
      %p201 = por %p199, %p200
      %p203 = scmp.ne.s32.totalorder %s186, %s202
      %p204 = scmp.eq.s32.totalorder %s26, 0
      %p205 = por %p203, %p204
      %p206 = scmp.le.s32.totalorder 1, %s20
      %p207 = scmp.lt.s32.totalorder %s20, 3
      %p208 = pnand %p206, %p207
      %p209 = pneg %p208
      // Predicated region
      $region9: #{positionwise_ffn.1} parent=5 // pred_check
        _
      $region10: #{positionwise_ffn.1} parent=5 // pred_check_branch
        %211 = sbr.rel (%p208) target = $region12
      $region11: #{positionwise_ffn.1} parent=5 // pred_region
        %s212 = ssub.s32 %s20, 1
        // Predicated region
        $region13: #{positionwise_ffn.1} parent=11 // pred_check
          %p213 = pneg %p67
        $region14: #{positionwise_ffn.1} parent=11 // pred_check_branch
          %215 = sbr.rel (%p213) target = $region16
        $region15: #{positionwise_ffn.1} parent=11 // pred_region
          %217 = vsyncadd [#allocation6], 0
          %s218 = sshll.u32 %s1, 4
          %s219 = int_to_ptr.hbm [resolvable:$true] %s218
          %s220 = sshll.u32 [#allocation5], 4
          %s221 = int_to_ptr.vmem [resolvable:$true] %s220
          %226 = dma.hbm_to_vmem [thread:$0]  %s219, 8192, %s221, [#allocation6], 256, 256, 16
        $region16: #{positionwise_ffn.1} parent=11 // pred_fallthru
          _
        // Predicated region
        $region17: #{positionwise_ffn.1} parent=11 // pred_check
          %p227 = pneg %p88
        $region18: #{positionwise_ffn.1} parent=11 // pred_check_branch
          %229 = sbr.rel (%p227) target = $region20
        $region19: #{positionwise_ffn.1} parent=11 // pred_region
          _
        $region20: #{positionwise_ffn.1} parent=11 // pred_fallthru
          _
        // Predicated region
        $region21: #{positionwise_ffn.1} parent=11 // pred_check
          %p230 = pneg %p109
        $region22: #{positionwise_ffn.1} parent=11 // pred_check_branch
          %232 = sbr.rel (%p230) target = $region24
        $region23: #{positionwise_ffn.1} parent=11 // pred_region
          %234 = vsyncadd [#allocation6], 0
          %s235 = sshll.u32 %s3, 4
          %s236 = int_to_ptr.hbm [resolvable:$true] %s235
          %s237 = sshll.u32 [#allocation7], 4
          %s238 = int_to_ptr.vmem [resolvable:$true] %s237
          %243 = dma.hbm_to_vmem [thread:$0]  %s236, 8192, %s238, [#allocation6], 128, 128, 8
        $region24: #{positionwise_ffn.1} parent=11 // pred_fallthru
          _
        // Predicated region
        $region25: #{positionwise_ffn.1} parent=11 // pred_check
          %p244 = pneg %p130
        $region26: #{positionwise_ffn.1} parent=11 // pred_check_branch
          %246 = sbr.rel (%p244) target = $region28
        $region27: #{positionwise_ffn.1} parent=11 // pred_region
          _
        $region28: #{positionwise_ffn.1} parent=11 // pred_fallthru
          _
        // Predicated region
        $region29: #{positionwise_ffn.1} parent=11 // pred_check
          %p247 = pneg %p151
        $region30: #{positionwise_ffn.1} parent=11 // pred_check_branch
          %249 = sbr.rel (%p247) target = $region32
        $region31: #{positionwise_ffn.1} parent=11 // pred_region
          _
        $region32: #{positionwise_ffn.1} parent=11 // pred_fallthru
          _
        // Predicated region
        $region33: #{positionwise_ffn.1} parent=11 // pred_check
          %p250 = pneg %p172
        $region34: #{positionwise_ffn.1} parent=11 // pred_check_branch
          %252 = sbr.rel (%p250) target = $region36
        $region35: #{positionwise_ffn.1} parent=11 // pred_region
          _
        $region36: #{positionwise_ffn.1} parent=11 // pred_fallthru
          _
      $region12: #{positionwise_ffn.1} parent=5 // pred_fallthru
        _
      %p253 = scmp.lt.s32.totalorder %s20, 2
      // Predicated region
      $region37: #{positionwise_ffn.1} parent=5 // pred_check
        %p254 = pneg %p253
      $region38: #{positionwise_ffn.1} parent=5 // pred_check_branch
        %256 = sbr.rel (%p254) target = $region40
      $region39: #{positionwise_ffn.1} parent=5 // pred_region
        // Predicated region
        $region41: #{positionwise_ffn.1} parent=39 // pred_check
          %p257 = pneg %p40
        $region42: #{positionwise_ffn.1} parent=39 // pred_check_branch
          %259 = sbr.rel (%p257) target = $region44
        $region43: #{positionwise_ffn.1} parent=39 // pred_region
          %s260 = sand.u32 %s30, 1
          %s261 = scalar_lea.sflag [#allocation3], %s260
          %s262 = sand.u32 %s30, 1
          %s263 = smul.addr %s262, 64
          %s264 = scalar_lea.vmem [#allocation2], %s263
          %s265 = smul.u32 8, %s20
          %267 = vsyncadd %s261, 0
          %s268 = smul.addr %s265, 2
          %s269 = smul.addr %s268, 4
          %s270 = scalar_lea.hbm %s0, %s269
          %s271 = sshll.u32 %s270, 4
          %s272 = int_to_ptr.hbm [resolvable:$true] %s271
          %s273 = sshll.u32 %s264, 4
          %s274 = int_to_ptr.vmem [resolvable:$true] %s273
          %279 = dma.hbm_to_vmem [thread:$0]  %s272, 1024, %s274, %s261, 128, 128, 8
        $region44: #{positionwise_ffn.1} parent=39 // pred_fallthru
          _
      $region40: #{positionwise_ffn.1} parent=5 // pred_fallthru
        _
      %p280 = scmp.le.s32.totalorder 1, %s20
      %p281 = scmp.lt.s32.totalorder %s20, 3
      %p282 = pnand %p280, %p281
      %p283 = pneg %p282
      // Predicated region
      $region45: #{positionwise_ffn.1} parent=5 // pred_check
        _
      $region46: #{positionwise_ffn.1} parent=5 // pred_check_branch
        %285 = sbr.rel (%p282) target = $region48
      $region47: #{positionwise_ffn.1} parent=5 // pred_region
        %s286 = ssub.s32 %s20, 1
        %s287 = sand.u32 %s33, 1
        %s288 = scalar_lea.sflag [#allocation3], %s287
        %s289 = sand.u32 %s33, 1
        %s290 = smul.addr %s289, 64
        %s291 = scalar_lea.vmem [#allocation2], %s290
        // Predicated region
        $region49: #{positionwise_ffn.1} parent=47 // pred_check
          %p292 = pneg %p46
        $region50: #{positionwise_ffn.1} parent=47 // pred_check_branch
          %294 = sbr.rel (%p292) target = $region52
        $region51: #{positionwise_ffn.1} parent=47 // pred_region
          %296 = dma.done %s288, 1024
        $region52: #{positionwise_ffn.1} parent=47 // pred_fallthru
          _
        // Predicated region
        $region53: #{positionwise_ffn.1} parent=47 // pred_check
          %p297 = pneg %p67
        $region54: #{positionwise_ffn.1} parent=47 // pred_check_branch
          %299 = sbr.rel (%p297) target = $region56
        $region55: #{positionwise_ffn.1} parent=47 // pred_region
          %301 = dma.done [#allocation6], 8192
        $region56: #{positionwise_ffn.1} parent=47 // pred_fallthru
          _
        // Predicated region
        $region57: #{positionwise_ffn.1} parent=47 // pred_check
          %p302 = pneg %p109
        $region58: #{positionwise_ffn.1} parent=47 // pred_check_branch
          %304 = sbr.rel (%p302) target = $region60
        $region59: #{positionwise_ffn.1} parent=47 // pred_region
          %306 = dma.done [#allocation6], 8192
        $region60: #{positionwise_ffn.1} parent=47 // pred_fallthru
          _
        %s307 = sand.u32 %s33, 1
        %s308 = scalar_lea.sflag [#allocation3], %s307
        %s309 = sand.u32 %s33, 1
        %s310 = smul.addr %s309, 64
        %s311 = scalar_lea.vmem [#allocation2], %s310
        %p312 = pneg %p46
        %p313 = pneg %p43
        %p314 = pneg %p67
        %p315 = pneg %p64
        %p316 = pneg %p88
        %p317 = pneg %p85
        %p318 = pneg %p109
        %p319 = pneg %p106
        %p320 = pneg %p130
        %p321 = pneg %p127
        %p322 = pneg %p151
        %p323 = pneg %p148
        %p324 = pneg %p172
        %p325 = pneg %p169
        %p326 = pneg %p198
        %p327 = pneg %p195
        %s328 = sand.u32 %s185, 1
        %s329 = scalar_lea.sflag [#allocation4], %s328
        %s330 = sand.u32 %s185, 1
        %s331 = smul.addr %s330, 64
        %s332 = scalar_lea.vmem [#allocation8], %s331
        %s333 = smul.u32 8, %s25
        %s334 = smul.u32 8, %s25
        %v335 = vld [vmem:[%s291] sm:$0xff]
        %v336 = vld [vmem:[%s291 + $0x8] sm:$0xff]
        %v337 = vld [vmem:[%s291 + $0x10] sm:$0xff]
        %v338 = vld [vmem:[%s291 + $0x18] sm:$0xff]
        %v339 = vld [vmem:[%s291 + $0x20] sm:$0xff]
        %v340 = vld [vmem:[%s291 + $0x28] sm:$0xff]
        %v341 = vld [vmem:[%s291 + $0x30] sm:$0xff]
        %v342 = vld [vmem:[%s291 + $0x38] sm:$0xff]
        %v343 = vld [vmem:[#allocation5] sm:$0xff]
        %v344 = vld [vmem:[#allocation5 + $0x8] sm:$0xff]
        %v345 = vld [vmem:[#allocation5 + $0x10] sm:$0xff]
        %v346 = vld [vmem:[#allocation5 + $0x18] sm:$0xff]
        %v347 = vld [vmem:[#allocation5 + $0x20] sm:$0xff]
        %v348 = vld [vmem:[#allocation5 + $0x28] sm:$0xff]
        %v349 = vld [vmem:[#allocation5 + $0x30] sm:$0xff]
        %v350 = vld [vmem:[#allocation5 + $0x38] sm:$0xff]
        %v351 = vld [vmem:[#allocation5 + $0x40] sm:$0xff]
        %v352 = vld [vmem:[#allocation5 + $0x48] sm:$0xff]
        %v353 = vld [vmem:[#allocation5 + $0x50] sm:$0xff]
        %v354 = vld [vmem:[#allocation5 + $0x58] sm:$0xff]
        %v355 = vld [vmem:[#allocation5 + $0x60] sm:$0xff]
        %v356 = vld [vmem:[#allocation5 + $0x68] sm:$0xff]
        %v357 = vld [vmem:[#allocation5 + $0x70] sm:$0xff]
        %v358 = vld [vmem:[#allocation5 + $0x78] sm:$0xff]
        %v359 = vld [vmem:[#allocation5 + $0x80] sm:$0xff]
        %v360 = vld [vmem:[#allocation5 + $0x88] sm:$0xff]
        %v361 = vld [vmem:[#allocation5 + $0x90] sm:$0xff]
        %v362 = vld [vmem:[#allocation5 + $0x98] sm:$0xff]
        %v363 = vld [vmem:[#allocation5 + $0xa0] sm:$0xff]
        %v364 = vld [vmem:[#allocation5 + $0xa8] sm:$0xff]
        %v365 = vld [vmem:[#allocation5 + $0xb0] sm:$0xff]
        %v366 = vld [vmem:[#allocation5 + $0xb8] sm:$0xff]
        %v367 = vld [vmem:[#allocation5 + $0xc0] sm:$0xff]
        %v368 = vld [vmem:[#allocation5 + $0xc8] sm:$0xff]
        %v369 = vld [vmem:[#allocation5 + $0xd0] sm:$0xff]
        %v370 = vld [vmem:[#allocation5 + $0xd8] sm:$0xff]
        %v371 = vld [vmem:[#allocation5 + $0xe0] sm:$0xff]
        %v372 = vld [vmem:[#allocation5 + $0xe8] sm:$0xff]
        %v373 = vld [vmem:[#allocation5 + $0xf0] sm:$0xff]
        %v374 = vld [vmem:[#allocation5 + $0xf8] sm:$0xff]
        %v375 = vld [vmem:[#allocation5 + $0x100] sm:$0xff]
        %v376 = vld [vmem:[#allocation5 + $0x108] sm:$0xff]
        %v377 = vld [vmem:[#allocation5 + $0x110] sm:$0xff]
        %v378 = vld [vmem:[#allocation5 + $0x118] sm:$0xff]
        %v379 = vld [vmem:[#allocation5 + $0x120] sm:$0xff]
        %v380 = vld [vmem:[#allocation5 + $0x128] sm:$0xff]
        %v381 = vld [vmem:[#allocation5 + $0x130] sm:$0xff]
        %v382 = vld [vmem:[#allocation5 + $0x138] sm:$0xff]
        %v383 = vld [vmem:[#allocation5 + $0x140] sm:$0xff]
        %v384 = vld [vmem:[#allocation5 + $0x148] sm:$0xff]
        %v385 = vld [vmem:[#allocation5 + $0x150] sm:$0xff]
        %v386 = vld [vmem:[#allocation5 + $0x158] sm:$0xff]
        %v387 = vld [vmem:[#allocation5 + $0x160] sm:$0xff]
        %v388 = vld [vmem:[#allocation5 + $0x168] sm:$0xff]
        %v389 = vld [vmem:[#allocation5 + $0x170] sm:$0xff]
        %v390 = vld [vmem:[#allocation5 + $0x178] sm:$0xff]
        %v391 = vld [vmem:[#allocation5 + $0x180] sm:$0xff]
        %v392 = vld [vmem:[#allocation5 + $0x188] sm:$0xff]
        %v393 = vld [vmem:[#allocation5 + $0x190] sm:$0xff]
        %v394 = vld [vmem:[#allocation5 + $0x198] sm:$0xff]
        %v395 = vld [vmem:[#allocation5 + $0x1a0] sm:$0xff]
        %v396 = vld [vmem:[#allocation5 + $0x1a8] sm:$0xff]
        %v397 = vld [vmem:[#allocation5 + $0x1b0] sm:$0xff]
        %v398 = vld [vmem:[#allocation5 + $0x1b8] sm:$0xff]
        %v399 = vld [vmem:[#allocation5 + $0x1c0] sm:$0xff]
        %v400 = vld [vmem:[#allocation5 + $0x1c8] sm:$0xff]
        %v401 = vld [vmem:[#allocation5 + $0x1d0] sm:$0xff]
        %v402 = vld [vmem:[#allocation5 + $0x1d8] sm:$0xff]
        %v403 = vld [vmem:[#allocation5 + $0x1e0] sm:$0xff]
        %v404 = vld [vmem:[#allocation5 + $0x1e8] sm:$0xff]
        %v405 = vld [vmem:[#allocation5 + $0x1f0] sm:$0xff]
        %v406 = vld [vmem:[#allocation5 + $0x1f8] sm:$0xff]
        %v407 = vld [vmem:[%s2] sm:$0xf]
        %v409 = vperm.slane %v407, 0
        %v410 = vperm.slane %v407, 1
        %v411 = vperm.slane %v407, 2
        %v412 = vperm.slane %v407, 3
        %v425 = vunpack.c.l.b16 %v335
        %v426 = vunpack.c.h.b16 %v335
        %v427 = vunpack.c.l.b16 %v336
        %v428 = vunpack.c.h.b16 %v336
        %v429 = vunpack.c.l.b16 %v337
        %v430 = vunpack.c.h.b16 %v337
        %v431 = vunpack.c.l.b16 %v338
        %v432 = vunpack.c.h.b16 %v338
        %v433 = vunpack.c.l.b16 %v339
        %v434 = vunpack.c.h.b16 %v339
        %v435 = vunpack.c.l.b16 %v340
        %v436 = vunpack.c.h.b16 %v340
        %v437 = vunpack.c.l.b16 %v341
        %v438 = vunpack.c.h.b16 %v341
        %v439 = vunpack.c.l.b16 %v342
        %v440 = vunpack.c.h.b16 %v342
        %v441 = vpack.c.b16 %v427, %v425
        %v442 = vpack.c.b16 %v428, %v426
        %v443 = vpack.c.b16 %v431, %v429
        %v444 = vpack.c.b16 %v432, %v430
        %v445 = vpack.c.b16 %v435, %v433
        %v446 = vpack.c.b16 %v436, %v434
        %v447 = vpack.c.b16 %v439, %v437
        %v448 = vpack.c.b16 %v440, %v438
        %v521 = vunpack.c.l.b16 %v343
        %v522 = vunpack.c.h.b16 %v343
        %v523 = vunpack.c.l.b16 %v344
        %v524 = vunpack.c.h.b16 %v344
        %v525 = vunpack.c.l.b16 %v345
        %v526 = vunpack.c.h.b16 %v345
        %v527 = vunpack.c.l.b16 %v346
        %v528 = vunpack.c.h.b16 %v346
        %v529 = vunpack.c.l.b16 %v347
        %v530 = vunpack.c.h.b16 %v347
        %v531 = vunpack.c.l.b16 %v348
        %v532 = vunpack.c.h.b16 %v348
        %v533 = vunpack.c.l.b16 %v349
        %v534 = vunpack.c.h.b16 %v349
        %v535 = vunpack.c.l.b16 %v350
        %v536 = vunpack.c.h.b16 %v350
        %v537 = vunpack.c.l.b16 %v351
        %v538 = vunpack.c.h.b16 %v351
        %v539 = vunpack.c.l.b16 %v352
        %v540 = vunpack.c.h.b16 %v352
        %v541 = vunpack.c.l.b16 %v353
        %v542 = vunpack.c.h.b16 %v353
        %v543 = vunpack.c.l.b16 %v354
        %v544 = vunpack.c.h.b16 %v354
        %v545 = vunpack.c.l.b16 %v355
        %v546 = vunpack.c.h.b16 %v355
        %v547 = vunpack.c.l.b16 %v356
        %v548 = vunpack.c.h.b16 %v356
        %v549 = vunpack.c.l.b16 %v357
        %v550 = vunpack.c.h.b16 %v357
        %v551 = vunpack.c.l.b16 %v358
        %v552 = vunpack.c.h.b16 %v358
        %v553 = vunpack.c.l.b16 %v359
        %v554 = vunpack.c.h.b16 %v359
        %v555 = vunpack.c.l.b16 %v360
        %v556 = vunpack.c.h.b16 %v360
        %v557 = vunpack.c.l.b16 %v361
        %v558 = vunpack.c.h.b16 %v361
        %v559 = vunpack.c.l.b16 %v362
        %v560 = vunpack.c.h.b16 %v362
        %v561 = vunpack.c.l.b16 %v363
        %v562 = vunpack.c.h.b16 %v363
        %v563 = vunpack.c.l.b16 %v364
        %v564 = vunpack.c.h.b16 %v364
        %v565 = vunpack.c.l.b16 %v365
        %v566 = vunpack.c.h.b16 %v365
        %v567 = vunpack.c.l.b16 %v366
        %v568 = vunpack.c.h.b16 %v366
        %v569 = vunpack.c.l.b16 %v367
        %v570 = vunpack.c.h.b16 %v367
        %v571 = vunpack.c.l.b16 %v368
        %v572 = vunpack.c.h.b16 %v368
        %v573 = vunpack.c.l.b16 %v369
        %v574 = vunpack.c.h.b16 %v369
        %v575 = vunpack.c.l.b16 %v370
        %v576 = vunpack.c.h.b16 %v370
        %v577 = vunpack.c.l.b16 %v371
        %v578 = vunpack.c.h.b16 %v371
        %v579 = vunpack.c.l.b16 %v372
        %v580 = vunpack.c.h.b16 %v372
        %v581 = vunpack.c.l.b16 %v373
        %v582 = vunpack.c.h.b16 %v373
        %v583 = vunpack.c.l.b16 %v374
        %v584 = vunpack.c.h.b16 %v374
        %v585 = vunpack.c.l.b16 %v375
        %v586 = vunpack.c.h.b16 %v375
        %v587 = vunpack.c.l.b16 %v376
        %v588 = vunpack.c.h.b16 %v376
        %v589 = vunpack.c.l.b16 %v377
        %v590 = vunpack.c.h.b16 %v377
        %v591 = vunpack.c.l.b16 %v378
        %v592 = vunpack.c.h.b16 %v378
        %v593 = vunpack.c.l.b16 %v379
        %v594 = vunpack.c.h.b16 %v379
        %v595 = vunpack.c.l.b16 %v380
        %v596 = vunpack.c.h.b16 %v380
        %v597 = vunpack.c.l.b16 %v381
        %v598 = vunpack.c.h.b16 %v381
        %v599 = vunpack.c.l.b16 %v382
        %v600 = vunpack.c.h.b16 %v382
        %v601 = vunpack.c.l.b16 %v383
        %v602 = vunpack.c.h.b16 %v383
        %v603 = vunpack.c.l.b16 %v384
        %v604 = vunpack.c.h.b16 %v384
        %v605 = vunpack.c.l.b16 %v385
        %v606 = vunpack.c.h.b16 %v385
        %v607 = vunpack.c.l.b16 %v386
        %v608 = vunpack.c.h.b16 %v386
        %v609 = vunpack.c.l.b16 %v387
        %v610 = vunpack.c.h.b16 %v387
        %v611 = vunpack.c.l.b16 %v388
        %v612 = vunpack.c.h.b16 %v388
        %v613 = vunpack.c.l.b16 %v389
        %v614 = vunpack.c.h.b16 %v389
        %v615 = vunpack.c.l.b16 %v390
        %v616 = vunpack.c.h.b16 %v390
        %v617 = vunpack.c.l.b16 %v391
        %v618 = vunpack.c.h.b16 %v391
        %v619 = vunpack.c.l.b16 %v392
        %v620 = vunpack.c.h.b16 %v392
        %v621 = vunpack.c.l.b16 %v393
        %v622 = vunpack.c.h.b16 %v393
        %v623 = vunpack.c.l.b16 %v394
        %v624 = vunpack.c.h.b16 %v394
        %v625 = vunpack.c.l.b16 %v395
        %v626 = vunpack.c.h.b16 %v395
        %v627 = vunpack.c.l.b16 %v396
        %v628 = vunpack.c.h.b16 %v396
        %v629 = vunpack.c.l.b16 %v397
        %v630 = vunpack.c.h.b16 %v397
        %v631 = vunpack.c.l.b16 %v398
        %v632 = vunpack.c.h.b16 %v398
        %v633 = vunpack.c.l.b16 %v399
        %v634 = vunpack.c.h.b16 %v399
        %v635 = vunpack.c.l.b16 %v400
        %v636 = vunpack.c.h.b16 %v400
        %v637 = vunpack.c.l.b16 %v401
        %v638 = vunpack.c.h.b16 %v401
        %v639 = vunpack.c.l.b16 %v402
        %v640 = vunpack.c.h.b16 %v402
        %v641 = vunpack.c.l.b16 %v403
        %v642 = vunpack.c.h.b16 %v403
        %v643 = vunpack.c.l.b16 %v404
        %v644 = vunpack.c.h.b16 %v404
        %v645 = vunpack.c.l.b16 %v405
        %v646 = vunpack.c.h.b16 %v405
        %v647 = vunpack.c.l.b16 %v406
        %v648 = vunpack.c.h.b16 %v406
        %v649 = vpack.c.b16 %v525, %v521
        %v650 = vpack.c.b16 %v526, %v522
        %v651 = vpack.c.b16 %v527, %v523
        %v652 = vpack.c.b16 %v528, %v524
        %v653 = vpack.c.b16 %v533, %v529
        %v654 = vpack.c.b16 %v534, %v530
        %v655 = vpack.c.b16 %v535, %v531
        %v656 = vpack.c.b16 %v536, %v532
        %v657 = vpack.c.b16 %v541, %v537
        %v658 = vpack.c.b16 %v542, %v538
        %v659 = vpack.c.b16 %v543, %v539
        %v660 = vpack.c.b16 %v544, %v540
        %v661 = vpack.c.b16 %v549, %v545
        %v662 = vpack.c.b16 %v550, %v546
        %v663 = vpack.c.b16 %v551, %v547
        %v664 = vpack.c.b16 %v552, %v548
        %v665 = vpack.c.b16 %v557, %v553
        %v666 = vpack.c.b16 %v558, %v554
        %v667 = vpack.c.b16 %v559, %v555
        %v668 = vpack.c.b16 %v560, %v556
        %v669 = vpack.c.b16 %v565, %v561
        %v670 = vpack.c.b16 %v566, %v562
        %v671 = vpack.c.b16 %v567, %v563
        %v672 = vpack.c.b16 %v568, %v564
        %v673 = vpack.c.b16 %v573, %v569
        %v674 = vpack.c.b16 %v574, %v570
        %v675 = vpack.c.b16 %v575, %v571
        %v676 = vpack.c.b16 %v576, %v572
        %v677 = vpack.c.b16 %v581, %v577
        %v678 = vpack.c.b16 %v582, %v578
        %v679 = vpack.c.b16 %v583, %v579
        %v680 = vpack.c.b16 %v584, %v580
        %v681 = vpack.c.b16 %v589, %v585
        %v682 = vpack.c.b16 %v590, %v586
        %v683 = vpack.c.b16 %v591, %v587
        %v684 = vpack.c.b16 %v592, %v588
        %v685 = vpack.c.b16 %v597, %v593
        %v686 = vpack.c.b16 %v598, %v594
        %v687 = vpack.c.b16 %v599, %v595
        %v688 = vpack.c.b16 %v600, %v596
        %v689 = vpack.c.b16 %v605, %v601
        %v690 = vpack.c.b16 %v606, %v602
        %v691 = vpack.c.b16 %v607, %v603
        %v692 = vpack.c.b16 %v608, %v604
        %v693 = vpack.c.b16 %v613, %v609
        %v694 = vpack.c.b16 %v614, %v610
        %v695 = vpack.c.b16 %v615, %v611
        %v696 = vpack.c.b16 %v616, %v612
        %v697 = vpack.c.b16 %v621, %v617
        %v698 = vpack.c.b16 %v622, %v618
        %v699 = vpack.c.b16 %v623, %v619
        %v700 = vpack.c.b16 %v624, %v620
        %v701 = vpack.c.b16 %v629, %v625
        %v702 = vpack.c.b16 %v630, %v626
        %v703 = vpack.c.b16 %v631, %v627
        %v704 = vpack.c.b16 %v632, %v628
        %v705 = vpack.c.b16 %v637, %v633
        %v706 = vpack.c.b16 %v638, %v634
        %v707 = vpack.c.b16 %v639, %v635
        %v708 = vpack.c.b16 %v640, %v636
        %v709 = vpack.c.b16 %v645, %v641
        %v710 = vpack.c.b16 %v646, %v642
        %v711 = vpack.c.b16 %v647, %v643
        %v712 = vpack.c.b16 %v648, %v644
        %777 = vmatpush.bf16.msra.mxu0 %v677
        %778 = vmatpush.bf16.msra.mxu0 %v673
        %779 = vmatpush.bf16.msra.mxu0 %v669
        %780 = vmatpush.bf16.msra.mxu0 %v665
        %781 = vmatpush.bf16.msra.mxu0 %v661
        %782 = vmatpush.bf16.msra.mxu0 %v657
        %783 = vmatpush.bf16.msra.mxu0 %v653
        %784 = vmatpush.bf16.msra.mxu0 %v649
        %785 = vmatmul.bf16.gmra.mxu0 %v441
        %v786 = vpop.f32.mrf.mxu0
        %v787 = vadd.f32 %v409, %v786
        %v788 = vpop.f32.mrf.mxu0
        %v789 = vadd.f32 %v409, %v788
        %790 = vmatmul.bf16.gmra.mxu0 %v443
        %v791 = vpop.f32.mrf.mxu0
        %v792 = vadd.f32 %v409, %v791
        %v793 = vpop.f32.mrf.mxu0
        %v794 = vadd.f32 %v409, %v793
        %795 = vmatmul.bf16.gmra.mxu0 %v445
        %v796 = vpop.f32.mrf.mxu0
        %v797 = vadd.f32 %v409, %v796
        %v798 = vpop.f32.mrf.mxu0
        %v799 = vadd.f32 %v409, %v798
        %800 = vmatmul.bf16.gmra.mxu0 %v447
        %v801 = vpop.f32.mrf.mxu0
        %v802 = vadd.f32 %v409, %v801
        %v803 = vpop.f32.mrf.mxu0
        %v804 = vadd.f32 %v409, %v803
        %805 = vdwg.mxu0
        %806 = vmatpush.bf16.msra.mxu0 %v709
        %807 = vmatpush.bf16.msra.mxu0 %v705
        %808 = vmatpush.bf16.msra.mxu0 %v701
        %809 = vmatpush.bf16.msra.mxu0 %v697
        %810 = vmatpush.bf16.msra.mxu0 %v693
        %811 = vmatpush.bf16.msra.mxu0 %v689
        %812 = vmatpush.bf16.msra.mxu0 %v685
        %813 = vmatpush.bf16.msra.mxu0 %v681
        %814 = vmatmul.bf16.gmra.mxu0 %v442
        %v815 = vpop.f32.mrf.mxu0
        %v816 = vadd.f32 %v787, %v815
        %v817 = vpop.f32.mrf.mxu0
        %v818 = vadd.f32 %v789, %v817
        %819 = vmatmul.bf16.gmra.mxu0 %v444
        %v820 = vpop.f32.mrf.mxu0
        %v821 = vadd.f32 %v792, %v820
        %v822 = vpop.f32.mrf.mxu0
        %v823 = vadd.f32 %v794, %v822
        %824 = vmatmul.bf16.gmra.mxu0 %v446
        %v825 = vpop.f32.mrf.mxu0
        %v826 = vadd.f32 %v797, %v825
        %v827 = vpop.f32.mrf.mxu0
        %v828 = vadd.f32 %v799, %v827
        %829 = vmatmul.bf16.gmra.mxu0 %v448
        %v830 = vpop.f32.mrf.mxu0
        %v831 = vadd.f32 %v802, %v830
        %v832 = vpop.f32.mrf.mxu0
        %v833 = vadd.f32 %v804, %v832
        %834 = vdwg.mxu0
        %835 = vmatpush.bf16.msra.mxu0 %v678
        %836 = vmatpush.bf16.msra.mxu0 %v674
        %837 = vmatpush.bf16.msra.mxu0 %v670
        %838 = vmatpush.bf16.msra.mxu0 %v666
        %839 = vmatpush.bf16.msra.mxu0 %v662
        %840 = vmatpush.bf16.msra.mxu0 %v658
        %841 = vmatpush.bf16.msra.mxu0 %v654
        %842 = vmatpush.bf16.msra.mxu0 %v650
        %843 = vmatmul.bf16.gmra.mxu0 %v441
        %v844 = vpop.f32.mrf.mxu0
        %v845 = vadd.f32 %v410, %v844
        %v846 = vpop.f32.mrf.mxu0
        %v847 = vadd.f32 %v410, %v846
        %848 = vmatmul.bf16.gmra.mxu0 %v443
        %v849 = vpop.f32.mrf.mxu0
        %v850 = vadd.f32 %v410, %v849
        %v851 = vpop.f32.mrf.mxu0
        %v852 = vadd.f32 %v410, %v851
        %853 = vmatmul.bf16.gmra.mxu0 %v445
        %v854 = vpop.f32.mrf.mxu0
        %v855 = vadd.f32 %v410, %v854
        %v856 = vpop.f32.mrf.mxu0
        %v857 = vadd.f32 %v410, %v856
        %858 = vmatmul.bf16.gmra.mxu0 %v447
        %v859 = vpop.f32.mrf.mxu0
        %v860 = vadd.f32 %v410, %v859
        %v861 = vpop.f32.mrf.mxu0
        %v862 = vadd.f32 %v410, %v861
        %863 = vdwg.mxu0
        %864 = vmatpush.bf16.msra.mxu0 %v710
        %865 = vmatpush.bf16.msra.mxu0 %v706
        %866 = vmatpush.bf16.msra.mxu0 %v702
        %867 = vmatpush.bf16.msra.mxu0 %v698
        %868 = vmatpush.bf16.msra.mxu0 %v694
        %869 = vmatpush.bf16.msra.mxu0 %v690
        %870 = vmatpush.bf16.msra.mxu0 %v686
        %871 = vmatpush.bf16.msra.mxu0 %v682
        %872 = vmatmul.bf16.gmra.mxu0 %v442
        %v873 = vpop.f32.mrf.mxu0
        %v874 = vadd.f32 %v845, %v873
        %v875 = vpop.f32.mrf.mxu0
        %v876 = vadd.f32 %v847, %v875
        %877 = vmatmul.bf16.gmra.mxu0 %v444
        %v878 = vpop.f32.mrf.mxu0
        %v879 = vadd.f32 %v850, %v878
        %v880 = vpop.f32.mrf.mxu0
        %v881 = vadd.f32 %v852, %v880
        %882 = vmatmul.bf16.gmra.mxu0 %v446
        %v883 = vpop.f32.mrf.mxu0
        %v884 = vadd.f32 %v855, %v883
        %v885 = vpop.f32.mrf.mxu0
        %v886 = vadd.f32 %v857, %v885
        %887 = vmatmul.bf16.gmra.mxu0 %v448
        %v888 = vpop.f32.mrf.mxu0
        %v889 = vadd.f32 %v860, %v888
        %v890 = vpop.f32.mrf.mxu0
        %v891 = vadd.f32 %v862, %v890
        %892 = vdwg.mxu0
        %893 = vmatpush.bf16.msra.mxu0 %v679
        %894 = vmatpush.bf16.msra.mxu0 %v675
        %895 = vmatpush.bf16.msra.mxu0 %v671
        %896 = vmatpush.bf16.msra.mxu0 %v667
        %897 = vmatpush.bf16.msra.mxu0 %v663
        %898 = vmatpush.bf16.msra.mxu0 %v659
        %899 = vmatpush.bf16.msra.mxu0 %v655
        %900 = vmatpush.bf16.msra.mxu0 %v651
        %901 = vmatmul.bf16.gmra.mxu0 %v441
        %v902 = vpop.f32.mrf.mxu0
        %v903 = vadd.f32 %v411, %v902
        %v904 = vpop.f32.mrf.mxu0
        %v905 = vadd.f32 %v411, %v904
        %906 = vmatmul.bf16.gmra.mxu0 %v443
        %v907 = vpop.f32.mrf.mxu0
        %v908 = vadd.f32 %v411, %v907
        %v909 = vpop.f32.mrf.mxu0
        %v910 = vadd.f32 %v411, %v909
        %911 = vmatmul.bf16.gmra.mxu0 %v445
        %v912 = vpop.f32.mrf.mxu0
        %v913 = vadd.f32 %v411, %v912
        %v914 = vpop.f32.mrf.mxu0
        %v915 = vadd.f32 %v411, %v914
        %916 = vmatmul.bf16.gmra.mxu0 %v447
        %v917 = vpop.f32.mrf.mxu0
        %v918 = vadd.f32 %v411, %v917
        %v919 = vpop.f32.mrf.mxu0
        %v920 = vadd.f32 %v411, %v919
        %921 = vdwg.mxu0
        %922 = vmatpush.bf16.msra.mxu0 %v711
        %923 = vmatpush.bf16.msra.mxu0 %v707
        %924 = vmatpush.bf16.msra.mxu0 %v703
        %925 = vmatpush.bf16.msra.mxu0 %v699
        %926 = vmatpush.bf16.msra.mxu0 %v695
        %927 = vmatpush.bf16.msra.mxu0 %v691
        %928 = vmatpush.bf16.msra.mxu0 %v687
        %929 = vmatpush.bf16.msra.mxu0 %v683
        %930 = vmatmul.bf16.gmra.mxu0 %v442
        %v931 = vpop.f32.mrf.mxu0
        %v932 = vadd.f32 %v903, %v931
        %v933 = vpop.f32.mrf.mxu0
        %v934 = vadd.f32 %v905, %v933
        %935 = vmatmul.bf16.gmra.mxu0 %v444
        %v936 = vpop.f32.mrf.mxu0
        %v937 = vadd.f32 %v908, %v936
        %v938 = vpop.f32.mrf.mxu0
        %v939 = vadd.f32 %v910, %v938
        %940 = vmatmul.bf16.gmra.mxu0 %v446
        %v941 = vpop.f32.mrf.mxu0
        %v942 = vadd.f32 %v913, %v941
        %v943 = vpop.f32.mrf.mxu0
        %v944 = vadd.f32 %v915, %v943
        %945 = vmatmul.bf16.gmra.mxu0 %v448
        %v946 = vpop.f32.mrf.mxu0
        %v947 = vadd.f32 %v918, %v946
        %v948 = vpop.f32.mrf.mxu0
        %v949 = vadd.f32 %v920, %v948
        %950 = vdwg.mxu0
        %951 = vmatpush.bf16.msra.mxu0 %v680
        %952 = vmatpush.bf16.msra.mxu0 %v676
        %953 = vmatpush.bf16.msra.mxu0 %v672
        %954 = vmatpush.bf16.msra.mxu0 %v668
        %955 = vmatpush.bf16.msra.mxu0 %v664
        %956 = vmatpush.bf16.msra.mxu0 %v660
        %957 = vmatpush.bf16.msra.mxu0 %v656
        %958 = vmatpush.bf16.msra.mxu0 %v652
        %959 = vmatmul.bf16.gmra.mxu0 %v441
        %v960 = vpop.f32.mrf.mxu0
        %v961 = vadd.f32 %v412, %v960
        %v962 = vpop.f32.mrf.mxu0
        %v963 = vadd.f32 %v412, %v962
        %964 = vmatmul.bf16.gmra.mxu0 %v443
        %v965 = vpop.f32.mrf.mxu0
        %v966 = vadd.f32 %v412, %v965
        %v967 = vpop.f32.mrf.mxu0
        %v968 = vadd.f32 %v412, %v967
        %969 = vmatmul.bf16.gmra.mxu0 %v445
        %v970 = vpop.f32.mrf.mxu0
        %v971 = vadd.f32 %v412, %v970
        %v972 = vpop.f32.mrf.mxu0
        %v973 = vadd.f32 %v412, %v972
        %974 = vmatmul.bf16.gmra.mxu0 %v447
        %v975 = vpop.f32.mrf.mxu0
        %v976 = vadd.f32 %v412, %v975
        %v977 = vpop.f32.mrf.mxu0
        %v978 = vadd.f32 %v412, %v977
        %979 = vdwg.mxu0
        %980 = vmatpush.bf16.msra.mxu0 %v712
        %981 = vmatpush.bf16.msra.mxu0 %v708
        %982 = vmatpush.bf16.msra.mxu0 %v704
        %983 = vmatpush.bf16.msra.mxu0 %v700
        %984 = vmatpush.bf16.msra.mxu0 %v696
        %985 = vmatpush.bf16.msra.mxu0 %v692
        %986 = vmatpush.bf16.msra.mxu0 %v688
        %987 = vmatpush.bf16.msra.mxu0 %v684
        %988 = vmatmul.bf16.gmra.mxu0 %v442
        %v989 = vpop.f32.mrf.mxu0
        %v990 = vadd.f32 %v961, %v989
        %v991 = vpop.f32.mrf.mxu0
        %v992 = vadd.f32 %v963, %v991
        %993 = vmatmul.bf16.gmra.mxu0 %v444
        %v994 = vpop.f32.mrf.mxu0
        %v995 = vadd.f32 %v966, %v994
        %v996 = vpop.f32.mrf.mxu0
        %v997 = vadd.f32 %v968, %v996
        %998 = vmatmul.bf16.gmra.mxu0 %v446
        %v999 = vpop.f32.mrf.mxu0
        %v1000 = vadd.f32 %v971, %v999
        %v1001 = vpop.f32.mrf.mxu0
        %v1002 = vadd.f32 %v973, %v1001
        %1003 = vmatmul.bf16.gmra.mxu0 %v448
        %v1004 = vpop.f32.mrf.mxu0
        %v1005 = vadd.f32 %v976, %v1004
        %v1006 = vpop.f32.mrf.mxu0
        %v1007 = vadd.f32 %v978, %v1006
        %1008 = vdwg.mxu0
        %v1009 = vmax.f32 %v816, 0.0
        %v1010 = vmax.f32 %v874, 0.0
        %v1011 = vmax.f32 %v932, 0.0
        %v1012 = vmax.f32 %v990, 0.0
        %v1013 = vmax.f32 %v818, 0.0
        %v1014 = vmax.f32 %v876, 0.0
        %v1015 = vmax.f32 %v934, 0.0
        %v1016 = vmax.f32 %v992, 0.0
        %v1017 = vmax.f32 %v821, 0.0
        %v1018 = vmax.f32 %v879, 0.0
        %v1019 = vmax.f32 %v937, 0.0
        %v1020 = vmax.f32 %v995, 0.0
        %v1021 = vmax.f32 %v823, 0.0
        %v1022 = vmax.f32 %v881, 0.0
        %v1023 = vmax.f32 %v939, 0.0
        %v1024 = vmax.f32 %v997, 0.0
        %v1025 = vmax.f32 %v826, 0.0
        %v1026 = vmax.f32 %v884, 0.0
        %v1027 = vmax.f32 %v942, 0.0
        %v1028 = vmax.f32 %v1000, 0.0
        %v1029 = vmax.f32 %v828, 0.0
        %v1030 = vmax.f32 %v886, 0.0
        %v1031 = vmax.f32 %v944, 0.0
        %v1032 = vmax.f32 %v1002, 0.0
        %v1033 = vmax.f32 %v831, 0.0
        %v1034 = vmax.f32 %v889, 0.0
        %v1035 = vmax.f32 %v947, 0.0
        %v1036 = vmax.f32 %v1005, 0.0
        %v1037 = vmax.f32 %v833, 0.0
        %v1038 = vmax.f32 %v891, 0.0
        %v1039 = vmax.f32 %v949, 0.0
        %v1040 = vmax.f32 %v1007, 0.0
        %v1041 = vpack.c.bf16 %v1013, %v1009
        %v1042 = vpack.c.bf16 %v1014, %v1010
        %v1043 = vpack.c.bf16 %v1015, %v1011
        %v1044 = vpack.c.bf16 %v1016, %v1012
        %v1045 = vpack.c.bf16 %v1021, %v1017
        %v1046 = vpack.c.bf16 %v1022, %v1018
        %v1047 = vpack.c.bf16 %v1023, %v1019
        %v1048 = vpack.c.bf16 %v1024, %v1020
        %v1049 = vpack.c.bf16 %v1029, %v1025
        %v1050 = vpack.c.bf16 %v1030, %v1026
        %v1051 = vpack.c.bf16 %v1031, %v1027
        %v1052 = vpack.c.bf16 %v1032, %v1028
        %v1053 = vpack.c.bf16 %v1037, %v1033
        %v1054 = vpack.c.bf16 %v1038, %v1034
        %v1055 = vpack.c.bf16 %v1039, %v1035
        %v1056 = vpack.c.bf16 %v1040, %v1036
        %v1057 = vld [vmem:[#allocation7] sm:$0xff]
        %v1058 = vld [vmem:[#allocation7 + $0x8] sm:$0xff]
        %v1059 = vld [vmem:[#allocation7 + $0x10] sm:$0xff]
        %v1060 = vld [vmem:[#allocation7 + $0x18] sm:$0xff]
        %v1061 = vld [vmem:[#allocation7 + $0x20] sm:$0xff]
        %v1062 = vld [vmem:[#allocation7 + $0x28] sm:$0xff]
        %v1063 = vld [vmem:[#allocation7 + $0x30] sm:$0xff]
        %v1064 = vld [vmem:[#allocation7 + $0x38] sm:$0xff]
        %v1065 = vld [vmem:[#allocation7 + $0x40] sm:$0xff]
        %v1066 = vld [vmem:[#allocation7 + $0x48] sm:$0xff]
        %v1067 = vld [vmem:[#allocation7 + $0x50] sm:$0xff]
        %v1068 = vld [vmem:[#allocation7 + $0x58] sm:$0xff]
        %v1069 = vld [vmem:[#allocation7 + $0x60] sm:$0xff]
        %v1070 = vld [vmem:[#allocation7 + $0x68] sm:$0xff]
        %v1071 = vld [vmem:[#allocation7 + $0x70] sm:$0xff]
        %v1072 = vld [vmem:[#allocation7 + $0x78] sm:$0xff]
        %v1073 = vld [vmem:[#allocation7 + $0x80] sm:$0xff]
        %v1074 = vld [vmem:[#allocation7 + $0x88] sm:$0xff]
        %v1075 = vld [vmem:[#allocation7 + $0x90] sm:$0xff]
        %v1076 = vld [vmem:[#allocation7 + $0x98] sm:$0xff]
        %v1077 = vld [vmem:[#allocation7 + $0xa0] sm:$0xff]
        %v1078 = vld [vmem:[#allocation7 + $0xa8] sm:$0xff]
        %v1079 = vld [vmem:[#allocation7 + $0xb0] sm:$0xff]
        %v1080 = vld [vmem:[#allocation7 + $0xb8] sm:$0xff]
        %v1081 = vld [vmem:[#allocation7 + $0xc0] sm:$0xff]
        %v1082 = vld [vmem:[#allocation7 + $0xc8] sm:$0xff]
        %v1083 = vld [vmem:[#allocation7 + $0xd0] sm:$0xff]
        %v1084 = vld [vmem:[#allocation7 + $0xd8] sm:$0xff]
        %v1085 = vld [vmem:[#allocation7 + $0xe0] sm:$0xff]
        %v1086 = vld [vmem:[#allocation7 + $0xe8] sm:$0xff]
        %v1087 = vld [vmem:[#allocation7 + $0xf0] sm:$0xff]
        %v1088 = vld [vmem:[#allocation7 + $0xf8] sm:$0xff]
        %v1089 = vld [vmem:[#allocation7 + $0x100] sm:$0xff]
        %v1090 = vld [vmem:[#allocation7 + $0x108] sm:$0xff]
        %v1091 = vld [vmem:[#allocation7 + $0x110] sm:$0xff]
        %v1092 = vld [vmem:[#allocation7 + $0x118] sm:$0xff]
        %v1093 = vld [vmem:[#allocation7 + $0x120] sm:$0xff]
        %v1094 = vld [vmem:[#allocation7 + $0x128] sm:$0xff]
        %v1095 = vld [vmem:[#allocation7 + $0x130] sm:$0xff]
        %v1096 = vld [vmem:[#allocation7 + $0x138] sm:$0xff]
        %v1097 = vld [vmem:[#allocation7 + $0x140] sm:$0xff]
        %v1098 = vld [vmem:[#allocation7 + $0x148] sm:$0xff]
        %v1099 = vld [vmem:[#allocation7 + $0x150] sm:$0xff]
        %v1100 = vld [vmem:[#allocation7 + $0x158] sm:$0xff]
        %v1101 = vld [vmem:[#allocation7 + $0x160] sm:$0xff]
        %v1102 = vld [vmem:[#allocation7 + $0x168] sm:$0xff]
        %v1103 = vld [vmem:[#allocation7 + $0x170] sm:$0xff]
        %v1104 = vld [vmem:[#allocation7 + $0x178] sm:$0xff]
        %v1105 = vld [vmem:[#allocation7 + $0x180] sm:$0xff]
        %v1106 = vld [vmem:[#allocation7 + $0x188] sm:$0xff]
        %v1107 = vld [vmem:[#allocation7 + $0x190] sm:$0xff]
        %v1108 = vld [vmem:[#allocation7 + $0x198] sm:$0xff]
        %v1109 = vld [vmem:[#allocation7 + $0x1a0] sm:$0xff]
        %v1110 = vld [vmem:[#allocation7 + $0x1a8] sm:$0xff]
        %v1111 = vld [vmem:[#allocation7 + $0x1b0] sm:$0xff]
        %v1112 = vld [vmem:[#allocation7 + $0x1b8] sm:$0xff]
        %v1113 = vld [vmem:[#allocation7 + $0x1c0] sm:$0xff]
        %v1114 = vld [vmem:[#allocation7 + $0x1c8] sm:$0xff]
        %v1115 = vld [vmem:[#allocation7 + $0x1d0] sm:$0xff]
        %v1116 = vld [vmem:[#allocation7 + $0x1d8] sm:$0xff]
        %v1117 = vld [vmem:[#allocation7 + $0x1e0] sm:$0xff]
        %v1118 = vld [vmem:[#allocation7 + $0x1e8] sm:$0xff]
        %v1119 = vld [vmem:[#allocation7 + $0x1f0] sm:$0xff]
        %v1120 = vld [vmem:[#allocation7 + $0x1f8] sm:$0xff]
        %v1121 = vld [vmem:[%s4] sm:$0x3]
        %v1123 = vperm.slane %v1121, 0
        %v1124 = vperm.slane %v1121, 1
        %v1191 = vunpack.c.l.b16 %v1057
        %v1192 = vunpack.c.h.b16 %v1057
        %v1193 = vunpack.c.l.b16 %v1058
        %v1194 = vunpack.c.h.b16 %v1058
        %v1195 = vunpack.c.l.b16 %v1059
        %v1196 = vunpack.c.h.b16 %v1059
        %v1197 = vunpack.c.l.b16 %v1060
        %v1198 = vunpack.c.h.b16 %v1060
        %v1199 = vunpack.c.l.b16 %v1061
        %v1200 = vunpack.c.h.b16 %v1061
        %v1201 = vunpack.c.l.b16 %v1062
        %v1202 = vunpack.c.h.b16 %v1062
        %v1203 = vunpack.c.l.b16 %v1063
        %v1204 = vunpack.c.h.b16 %v1063
        %v1205 = vunpack.c.l.b16 %v1064
        %v1206 = vunpack.c.h.b16 %v1064
        %v1207 = vunpack.c.l.b16 %v1065
        %v1208 = vunpack.c.h.b16 %v1065
        %v1209 = vunpack.c.l.b16 %v1066
        %v1210 = vunpack.c.h.b16 %v1066
        %v1211 = vunpack.c.l.b16 %v1067
        %v1212 = vunpack.c.h.b16 %v1067
        %v1213 = vunpack.c.l.b16 %v1068
        %v1214 = vunpack.c.h.b16 %v1068
        %v1215 = vunpack.c.l.b16 %v1069
        %v1216 = vunpack.c.h.b16 %v1069
        %v1217 = vunpack.c.l.b16 %v1070
        %v1218 = vunpack.c.h.b16 %v1070
        %v1219 = vunpack.c.l.b16 %v1071
        %v1220 = vunpack.c.h.b16 %v1071
        %v1221 = vunpack.c.l.b16 %v1072
        %v1222 = vunpack.c.h.b16 %v1072
        %v1223 = vunpack.c.l.b16 %v1073
        %v1224 = vunpack.c.h.b16 %v1073
        %v1225 = vunpack.c.l.b16 %v1074
        %v1226 = vunpack.c.h.b16 %v1074
        %v1227 = vunpack.c.l.b16 %v1075
        %v1228 = vunpack.c.h.b16 %v1075
        %v1229 = vunpack.c.l.b16 %v1076
        %v1230 = vunpack.c.h.b16 %v1076
        %v1231 = vunpack.c.l.b16 %v1077
        %v1232 = vunpack.c.h.b16 %v1077
        %v1233 = vunpack.c.l.b16 %v1078
        %v1234 = vunpack.c.h.b16 %v1078
        %v1235 = vunpack.c.l.b16 %v1079
        %v1236 = vunpack.c.h.b16 %v1079
        %v1237 = vunpack.c.l.b16 %v1080
        %v1238 = vunpack.c.h.b16 %v1080
        %v1239 = vunpack.c.l.b16 %v1081
        %v1240 = vunpack.c.h.b16 %v1081
        %v1241 = vunpack.c.l.b16 %v1082
        %v1242 = vunpack.c.h.b16 %v1082
        %v1243 = vunpack.c.l.b16 %v1083
        %v1244 = vunpack.c.h.b16 %v1083
        %v1245 = vunpack.c.l.b16 %v1084
        %v1246 = vunpack.c.h.b16 %v1084
        %v1247 = vunpack.c.l.b16 %v1085
        %v1248 = vunpack.c.h.b16 %v1085
        %v1249 = vunpack.c.l.b16 %v1086
        %v1250 = vunpack.c.h.b16 %v1086
        %v1251 = vunpack.c.l.b16 %v1087
        %v1252 = vunpack.c.h.b16 %v1087
        %v1253 = vunpack.c.l.b16 %v1088
        %v1254 = vunpack.c.h.b16 %v1088
        %v1255 = vunpack.c.l.b16 %v1089
        %v1256 = vunpack.c.h.b16 %v1089
        %v1257 = vunpack.c.l.b16 %v1090
        %v1258 = vunpack.c.h.b16 %v1090
        %v1259 = vunpack.c.l.b16 %v1091
        %v1260 = vunpack.c.h.b16 %v1091
        %v1261 = vunpack.c.l.b16 %v1092
        %v1262 = vunpack.c.h.b16 %v1092
        %v1263 = vunpack.c.l.b16 %v1093
        %v1264 = vunpack.c.h.b16 %v1093
        %v1265 = vunpack.c.l.b16 %v1094
        %v1266 = vunpack.c.h.b16 %v1094
        %v1267 = vunpack.c.l.b16 %v1095
        %v1268 = vunpack.c.h.b16 %v1095
        %v1269 = vunpack.c.l.b16 %v1096
        %v1270 = vunpack.c.h.b16 %v1096
        %v1271 = vunpack.c.l.b16 %v1097
        %v1272 = vunpack.c.h.b16 %v1097
        %v1273 = vunpack.c.l.b16 %v1098
        %v1274 = vunpack.c.h.b16 %v1098
        %v1275 = vunpack.c.l.b16 %v1099
        %v1276 = vunpack.c.h.b16 %v1099
        %v1277 = vunpack.c.l.b16 %v1100
        %v1278 = vunpack.c.h.b16 %v1100
        %v1279 = vunpack.c.l.b16 %v1101
        %v1280 = vunpack.c.h.b16 %v1101
        %v1281 = vunpack.c.l.b16 %v1102
        %v1282 = vunpack.c.h.b16 %v1102
        %v1283 = vunpack.c.l.b16 %v1103
        %v1284 = vunpack.c.h.b16 %v1103
        %v1285 = vunpack.c.l.b16 %v1104
        %v1286 = vunpack.c.h.b16 %v1104
        %v1287 = vunpack.c.l.b16 %v1105
        %v1288 = vunpack.c.h.b16 %v1105
        %v1289 = vunpack.c.l.b16 %v1106
        %v1290 = vunpack.c.h.b16 %v1106
        %v1291 = vunpack.c.l.b16 %v1107
        %v1292 = vunpack.c.h.b16 %v1107
        %v1293 = vunpack.c.l.b16 %v1108
        %v1294 = vunpack.c.h.b16 %v1108
        %v1295 = vunpack.c.l.b16 %v1109
        %v1296 = vunpack.c.h.b16 %v1109
        %v1297 = vunpack.c.l.b16 %v1110
        %v1298 = vunpack.c.h.b16 %v1110
        %v1299 = vunpack.c.l.b16 %v1111
        %v1300 = vunpack.c.h.b16 %v1111
        %v1301 = vunpack.c.l.b16 %v1112
        %v1302 = vunpack.c.h.b16 %v1112
        %v1303 = vunpack.c.l.b16 %v1113
        %v1304 = vunpack.c.h.b16 %v1113
        %v1305 = vunpack.c.l.b16 %v1114
        %v1306 = vunpack.c.h.b16 %v1114
        %v1307 = vunpack.c.l.b16 %v1115
        %v1308 = vunpack.c.h.b16 %v1115
        %v1309 = vunpack.c.l.b16 %v1116
        %v1310 = vunpack.c.h.b16 %v1116
        %v1311 = vunpack.c.l.b16 %v1117
        %v1312 = vunpack.c.h.b16 %v1117
        %v1313 = vunpack.c.l.b16 %v1118
        %v1314 = vunpack.c.h.b16 %v1118
        %v1315 = vunpack.c.l.b16 %v1119
        %v1316 = vunpack.c.h.b16 %v1119
        %v1317 = vunpack.c.l.b16 %v1120
        %v1318 = vunpack.c.h.b16 %v1120
        %v1319 = vpack.c.b16 %v1193, %v1191
        %v1320 = vpack.c.b16 %v1194, %v1192
        %v1321 = vpack.c.b16 %v1197, %v1195
        %v1322 = vpack.c.b16 %v1198, %v1196
        %v1323 = vpack.c.b16 %v1201, %v1199
        %v1324 = vpack.c.b16 %v1202, %v1200
        %v1325 = vpack.c.b16 %v1205, %v1203
        %v1326 = vpack.c.b16 %v1206, %v1204
        %v1327 = vpack.c.b16 %v1209, %v1207
        %v1328 = vpack.c.b16 %v1210, %v1208
        %v1329 = vpack.c.b16 %v1213, %v1211
        %v1330 = vpack.c.b16 %v1214, %v1212
        %v1331 = vpack.c.b16 %v1217, %v1215
        %v1332 = vpack.c.b16 %v1218, %v1216
        %v1333 = vpack.c.b16 %v1221, %v1219
        %v1334 = vpack.c.b16 %v1222, %v1220
        %v1335 = vpack.c.b16 %v1225, %v1223
        %v1336 = vpack.c.b16 %v1226, %v1224
        %v1337 = vpack.c.b16 %v1229, %v1227
        %v1338 = vpack.c.b16 %v1230, %v1228
        %v1339 = vpack.c.b16 %v1233, %v1231
        %v1340 = vpack.c.b16 %v1234, %v1232
        %v1341 = vpack.c.b16 %v1237, %v1235
        %v1342 = vpack.c.b16 %v1238, %v1236
        %v1343 = vpack.c.b16 %v1241, %v1239
        %v1344 = vpack.c.b16 %v1242, %v1240
        %v1345 = vpack.c.b16 %v1245, %v1243
        %v1346 = vpack.c.b16 %v1246, %v1244
        %v1347 = vpack.c.b16 %v1249, %v1247
        %v1348 = vpack.c.b16 %v1250, %v1248
        %v1349 = vpack.c.b16 %v1253, %v1251
        %v1350 = vpack.c.b16 %v1254, %v1252
        %v1351 = vpack.c.b16 %v1257, %v1255
        %v1352 = vpack.c.b16 %v1258, %v1256
        %v1353 = vpack.c.b16 %v1261, %v1259
        %v1354 = vpack.c.b16 %v1262, %v1260
        %v1355 = vpack.c.b16 %v1265, %v1263
        %v1356 = vpack.c.b16 %v1266, %v1264
        %v1357 = vpack.c.b16 %v1269, %v1267
        %v1358 = vpack.c.b16 %v1270, %v1268
        %v1359 = vpack.c.b16 %v1273, %v1271
        %v1360 = vpack.c.b16 %v1274, %v1272
        %v1361 = vpack.c.b16 %v1277, %v1275
        %v1362 = vpack.c.b16 %v1278, %v1276
        %v1363 = vpack.c.b16 %v1281, %v1279
        %v1364 = vpack.c.b16 %v1282, %v1280
        %v1365 = vpack.c.b16 %v1285, %v1283
        %v1366 = vpack.c.b16 %v1286, %v1284
        %v1367 = vpack.c.b16 %v1289, %v1287
        %v1368 = vpack.c.b16 %v1290, %v1288
        %v1369 = vpack.c.b16 %v1293, %v1291
        %v1370 = vpack.c.b16 %v1294, %v1292
        %v1371 = vpack.c.b16 %v1297, %v1295
        %v1372 = vpack.c.b16 %v1298, %v1296
        %v1373 = vpack.c.b16 %v1301, %v1299
        %v1374 = vpack.c.b16 %v1302, %v1300
        %v1375 = vpack.c.b16 %v1305, %v1303
        %v1376 = vpack.c.b16 %v1306, %v1304
        %v1377 = vpack.c.b16 %v1309, %v1307
        %v1378 = vpack.c.b16 %v1310, %v1308
        %v1379 = vpack.c.b16 %v1313, %v1311
        %v1380 = vpack.c.b16 %v1314, %v1312
        %v1381 = vpack.c.b16 %v1317, %v1315
        %v1382 = vpack.c.b16 %v1318, %v1316
        %1447 = vmatpush.bf16.msra.mxu0 %v1333
        %1448 = vmatpush.bf16.msra.mxu0 %v1331
        %1449 = vmatpush.bf16.msra.mxu0 %v1329
        %1450 = vmatpush.bf16.msra.mxu0 %v1327
        %1451 = vmatpush.bf16.msra.mxu0 %v1325
        %1452 = vmatpush.bf16.msra.mxu0 %v1323
        %1453 = vmatpush.bf16.msra.mxu0 %v1321
        %1454 = vmatpush.bf16.msra.mxu0 %v1319
        %1455 = vmatmul.bf16.gmra.mxu0 %v1041
        %v1456 = vpop.f32.mrf.mxu0
        %v1457 = vadd.f32 %v1123, %v1456
        %v1458 = vpop.f32.mrf.mxu0
        %v1459 = vadd.f32 %v1123, %v1458
        %1460 = vmatmul.bf16.gmra.mxu0 %v1045
        %v1461 = vpop.f32.mrf.mxu0
        %v1462 = vadd.f32 %v1123, %v1461
        %v1463 = vpop.f32.mrf.mxu0
        %v1464 = vadd.f32 %v1123, %v1463
        %1465 = vmatmul.bf16.gmra.mxu0 %v1049
        %v1466 = vpop.f32.mrf.mxu0
        %v1467 = vadd.f32 %v1123, %v1466
        %v1468 = vpop.f32.mrf.mxu0
        %v1469 = vadd.f32 %v1123, %v1468
        %1470 = vmatmul.bf16.gmra.mxu0 %v1053
        %v1471 = vpop.f32.mrf.mxu0
        %v1472 = vadd.f32 %v1123, %v1471
        %v1473 = vpop.f32.mrf.mxu0
        %v1474 = vadd.f32 %v1123, %v1473
        %1475 = vdwg.mxu0
        %1476 = vmatpush.bf16.msra.mxu0 %v1349
        %1477 = vmatpush.bf16.msra.mxu0 %v1347
        %1478 = vmatpush.bf16.msra.mxu0 %v1345
        %1479 = vmatpush.bf16.msra.mxu0 %v1343
        %1480 = vmatpush.bf16.msra.mxu0 %v1341
        %1481 = vmatpush.bf16.msra.mxu0 %v1339
        %1482 = vmatpush.bf16.msra.mxu0 %v1337
        %1483 = vmatpush.bf16.msra.mxu0 %v1335
        %1484 = vmatmul.bf16.gmra.mxu0 %v1042
        %v1485 = vpop.f32.mrf.mxu0
        %v1486 = vadd.f32 %v1457, %v1485
        %v1487 = vpop.f32.mrf.mxu0
        %v1488 = vadd.f32 %v1459, %v1487
        %1489 = vmatmul.bf16.gmra.mxu0 %v1046
        %v1490 = vpop.f32.mrf.mxu0
        %v1491 = vadd.f32 %v1462, %v1490
        %v1492 = vpop.f32.mrf.mxu0
        %v1493 = vadd.f32 %v1464, %v1492
        %1494 = vmatmul.bf16.gmra.mxu0 %v1050
        %v1495 = vpop.f32.mrf.mxu0
        %v1496 = vadd.f32 %v1467, %v1495
        %v1497 = vpop.f32.mrf.mxu0
        %v1498 = vadd.f32 %v1469, %v1497
        %1499 = vmatmul.bf16.gmra.mxu0 %v1054
        %v1500 = vpop.f32.mrf.mxu0
        %v1501 = vadd.f32 %v1472, %v1500
        %v1502 = vpop.f32.mrf.mxu0
        %v1503 = vadd.f32 %v1474, %v1502
        %1504 = vdwg.mxu0
        %1505 = vmatpush.bf16.msra.mxu0 %v1365
        %1506 = vmatpush.bf16.msra.mxu0 %v1363
        %1507 = vmatpush.bf16.msra.mxu0 %v1361
        %1508 = vmatpush.bf16.msra.mxu0 %v1359
        %1509 = vmatpush.bf16.msra.mxu0 %v1357
        %1510 = vmatpush.bf16.msra.mxu0 %v1355
        %1511 = vmatpush.bf16.msra.mxu0 %v1353
        %1512 = vmatpush.bf16.msra.mxu0 %v1351
        %1513 = vmatmul.bf16.gmra.mxu0 %v1043
        %v1514 = vpop.f32.mrf.mxu0
        %v1515 = vadd.f32 %v1486, %v1514
        %v1516 = vpop.f32.mrf.mxu0
        %v1517 = vadd.f32 %v1488, %v1516
        %1518 = vmatmul.bf16.gmra.mxu0 %v1047
        %v1519 = vpop.f32.mrf.mxu0
        %v1520 = vadd.f32 %v1491, %v1519
        %v1521 = vpop.f32.mrf.mxu0
        %v1522 = vadd.f32 %v1493, %v1521
        %1523 = vmatmul.bf16.gmra.mxu0 %v1051
        %v1524 = vpop.f32.mrf.mxu0
        %v1525 = vadd.f32 %v1496, %v1524
        %v1526 = vpop.f32.mrf.mxu0
        %v1527 = vadd.f32 %v1498, %v1526
        %1528 = vmatmul.bf16.gmra.mxu0 %v1055
        %v1529 = vpop.f32.mrf.mxu0
        %v1530 = vadd.f32 %v1501, %v1529
        %v1531 = vpop.f32.mrf.mxu0
        %v1532 = vadd.f32 %v1503, %v1531
        %1533 = vdwg.mxu0
        %1534 = vmatpush.bf16.msra.mxu0 %v1381
        %1535 = vmatpush.bf16.msra.mxu0 %v1379
        %1536 = vmatpush.bf16.msra.mxu0 %v1377
        %1537 = vmatpush.bf16.msra.mxu0 %v1375
        %1538 = vmatpush.bf16.msra.mxu0 %v1373
        %1539 = vmatpush.bf16.msra.mxu0 %v1371
        %1540 = vmatpush.bf16.msra.mxu0 %v1369
        %1541 = vmatpush.bf16.msra.mxu0 %v1367
        %1542 = vmatmul.bf16.gmra.mxu0 %v1044
        %v1543 = vpop.f32.mrf.mxu0
        %v1544 = vadd.f32 %v1515, %v1543
        %v1545 = vpop.f32.mrf.mxu0
        %v1546 = vadd.f32 %v1517, %v1545
        %1547 = vmatmul.bf16.gmra.mxu0 %v1048
        %v1548 = vpop.f32.mrf.mxu0
        %v1549 = vadd.f32 %v1520, %v1548
        %v1550 = vpop.f32.mrf.mxu0
        %v1551 = vadd.f32 %v1522, %v1550
        %1552 = vmatmul.bf16.gmra.mxu0 %v1052
        %v1553 = vpop.f32.mrf.mxu0
        %v1554 = vadd.f32 %v1525, %v1553
        %v1555 = vpop.f32.mrf.mxu0
        %v1556 = vadd.f32 %v1527, %v1555
        %1557 = vmatmul.bf16.gmra.mxu0 %v1056
        %v1558 = vpop.f32.mrf.mxu0
        %v1559 = vadd.f32 %v1530, %v1558
        %v1560 = vpop.f32.mrf.mxu0
        %v1561 = vadd.f32 %v1532, %v1560
        %1562 = vdwg.mxu0
        %1563 = vmatpush.bf16.msra.mxu0 %v1334
        %1564 = vmatpush.bf16.msra.mxu0 %v1332
        %1565 = vmatpush.bf16.msra.mxu0 %v1330
        %1566 = vmatpush.bf16.msra.mxu0 %v1328
        %1567 = vmatpush.bf16.msra.mxu0 %v1326
        %1568 = vmatpush.bf16.msra.mxu0 %v1324
        %1569 = vmatpush.bf16.msra.mxu0 %v1322
        %1570 = vmatpush.bf16.msra.mxu0 %v1320
        %1571 = vmatmul.bf16.gmra.mxu0 %v1041
        %v1572 = vpop.f32.mrf.mxu0
        %v1573 = vadd.f32 %v1124, %v1572
        %v1574 = vpop.f32.mrf.mxu0
        %v1575 = vadd.f32 %v1124, %v1574
        %1576 = vmatmul.bf16.gmra.mxu0 %v1045
        %v1577 = vpop.f32.mrf.mxu0
        %v1578 = vadd.f32 %v1124, %v1577
        %v1579 = vpop.f32.mrf.mxu0
        %v1580 = vadd.f32 %v1124, %v1579
        %1581 = vmatmul.bf16.gmra.mxu0 %v1049
        %v1582 = vpop.f32.mrf.mxu0
        %v1583 = vadd.f32 %v1124, %v1582
        %v1584 = vpop.f32.mrf.mxu0
        %v1585 = vadd.f32 %v1124, %v1584
        %1586 = vmatmul.bf16.gmra.mxu0 %v1053
        %v1587 = vpop.f32.mrf.mxu0
        %v1588 = vadd.f32 %v1124, %v1587
        %v1589 = vpop.f32.mrf.mxu0
        %v1590 = vadd.f32 %v1124, %v1589
        %1591 = vdwg.mxu0
        %1592 = vmatpush.bf16.msra.mxu0 %v1350
        %1593 = vmatpush.bf16.msra.mxu0 %v1348
        %1594 = vmatpush.bf16.msra.mxu0 %v1346
        %1595 = vmatpush.bf16.msra.mxu0 %v1344
        %1596 = vmatpush.bf16.msra.mxu0 %v1342
        %1597 = vmatpush.bf16.msra.mxu0 %v1340
        %1598 = vmatpush.bf16.msra.mxu0 %v1338
        %1599 = vmatpush.bf16.msra.mxu0 %v1336
        %1600 = vmatmul.bf16.gmra.mxu0 %v1042
        %v1601 = vpop.f32.mrf.mxu0
        %v1602 = vadd.f32 %v1573, %v1601
        %v1603 = vpop.f32.mrf.mxu0
        %v1604 = vadd.f32 %v1575, %v1603
        %1605 = vmatmul.bf16.gmra.mxu0 %v1046
        %v1606 = vpop.f32.mrf.mxu0
        %v1607 = vadd.f32 %v1578, %v1606
        %v1608 = vpop.f32.mrf.mxu0
        %v1609 = vadd.f32 %v1580, %v1608
        %1610 = vmatmul.bf16.gmra.mxu0 %v1050
        %v1611 = vpop.f32.mrf.mxu0
        %v1612 = vadd.f32 %v1583, %v1611
        %v1613 = vpop.f32.mrf.mxu0
        %v1614 = vadd.f32 %v1585, %v1613
        %1615 = vmatmul.bf16.gmra.mxu0 %v1054
        %v1616 = vpop.f32.mrf.mxu0
        %v1617 = vadd.f32 %v1588, %v1616
        %v1618 = vpop.f32.mrf.mxu0
        %v1619 = vadd.f32 %v1590, %v1618
        %1620 = vdwg.mxu0
        %1621 = vmatpush.bf16.msra.mxu0 %v1366
        %1622 = vmatpush.bf16.msra.mxu0 %v1364
        %1623 = vmatpush.bf16.msra.mxu0 %v1362
        %1624 = vmatpush.bf16.msra.mxu0 %v1360
        %1625 = vmatpush.bf16.msra.mxu0 %v1358
        %1626 = vmatpush.bf16.msra.mxu0 %v1356
        %1627 = vmatpush.bf16.msra.mxu0 %v1354
        %1628 = vmatpush.bf16.msra.mxu0 %v1352
        %1629 = vmatmul.bf16.gmra.mxu0 %v1043
        %v1630 = vpop.f32.mrf.mxu0
        %v1631 = vadd.f32 %v1602, %v1630
        %v1632 = vpop.f32.mrf.mxu0
        %v1633 = vadd.f32 %v1604, %v1632
        %1634 = vmatmul.bf16.gmra.mxu0 %v1047
        %v1635 = vpop.f32.mrf.mxu0
        %v1636 = vadd.f32 %v1607, %v1635
        %v1637 = vpop.f32.mrf.mxu0
        %v1638 = vadd.f32 %v1609, %v1637
        %1639 = vmatmul.bf16.gmra.mxu0 %v1051
        %v1640 = vpop.f32.mrf.mxu0
        %v1641 = vadd.f32 %v1612, %v1640
        %v1642 = vpop.f32.mrf.mxu0
        %v1643 = vadd.f32 %v1614, %v1642
        %1644 = vmatmul.bf16.gmra.mxu0 %v1055
        %v1645 = vpop.f32.mrf.mxu0
        %v1646 = vadd.f32 %v1617, %v1645
        %v1647 = vpop.f32.mrf.mxu0
        %v1648 = vadd.f32 %v1619, %v1647
        %1649 = vdwg.mxu0
        %1650 = vmatpush.bf16.msra.mxu0 %v1382
        %1651 = vmatpush.bf16.msra.mxu0 %v1380
        %1652 = vmatpush.bf16.msra.mxu0 %v1378
        %1653 = vmatpush.bf16.msra.mxu0 %v1376
        %1654 = vmatpush.bf16.msra.mxu0 %v1374
        %1655 = vmatpush.bf16.msra.mxu0 %v1372
        %1656 = vmatpush.bf16.msra.mxu0 %v1370
        %1657 = vmatpush.bf16.msra.mxu0 %v1368
        %1658 = vmatmul.bf16.gmra.mxu0 %v1044
        %v1659 = vpop.f32.mrf.mxu0
        %v1660 = vadd.f32 %v1631, %v1659
        %v1661 = vpop.f32.mrf.mxu0
        %v1662 = vadd.f32 %v1633, %v1661
        %1663 = vmatmul.bf16.gmra.mxu0 %v1048
        %v1664 = vpop.f32.mrf.mxu0
        %v1665 = vadd.f32 %v1636, %v1664
        %v1666 = vpop.f32.mrf.mxu0
        %v1667 = vadd.f32 %v1638, %v1666
        %1668 = vmatmul.bf16.gmra.mxu0 %v1052
        %v1669 = vpop.f32.mrf.mxu0
        %v1670 = vadd.f32 %v1641, %v1669
        %v1671 = vpop.f32.mrf.mxu0
        %v1672 = vadd.f32 %v1643, %v1671
        %1673 = vmatmul.bf16.gmra.mxu0 %v1056
        %v1674 = vpop.f32.mrf.mxu0
        %v1675 = vadd.f32 %v1646, %v1674
        %v1676 = vpop.f32.mrf.mxu0
        %v1677 = vadd.f32 %v1648, %v1676
        %1678 = vdwg.mxu0
        %v1679 = vunpack.c.l.bf16 %v335
        %v1680 = vunpack.c.h.bf16 %v335
        %v1681 = vunpack.c.l.bf16 %v336
        %v1682 = vunpack.c.h.bf16 %v336
        %v1683 = vunpack.c.l.bf16 %v337
        %v1684 = vunpack.c.h.bf16 %v337
        %v1685 = vunpack.c.l.bf16 %v338
        %v1686 = vunpack.c.h.bf16 %v338
        %v1687 = vunpack.c.l.bf16 %v339
        %v1688 = vunpack.c.h.bf16 %v339
        %v1689 = vunpack.c.l.bf16 %v340
        %v1690 = vunpack.c.h.bf16 %v340
        %v1691 = vunpack.c.l.bf16 %v341
        %v1692 = vunpack.c.h.bf16 %v341
        %v1693 = vunpack.c.l.bf16 %v342
        %v1694 = vunpack.c.h.bf16 %v342
        %v1695 = vadd.f32 %v1544, %v1679
        %v1696 = vadd.f32 %v1660, %v1680
        %v1697 = vadd.f32 %v1546, %v1681
        %v1698 = vadd.f32 %v1662, %v1682
        %v1699 = vadd.f32 %v1549, %v1683
        %v1700 = vadd.f32 %v1665, %v1684
        %v1701 = vadd.f32 %v1551, %v1685
        %v1702 = vadd.f32 %v1667, %v1686
        %v1703 = vadd.f32 %v1554, %v1687
        %v1704 = vadd.f32 %v1670, %v1688
        %v1705 = vadd.f32 %v1556, %v1689
        %v1706 = vadd.f32 %v1672, %v1690
        %v1707 = vadd.f32 %v1559, %v1691
        %v1708 = vadd.f32 %v1675, %v1692
        %v1709 = vadd.f32 %v1561, %v1693
        %v1710 = vadd.f32 %v1677, %v1694
        %v1711 = vld [vmem:[%s5] sm:$0x3]
        %v1712 = vld [vmem:[%s6] sm:$0x3]
        %v1713 = vadd.f32 %v1695, %v1696
        %1714 = vadd.xlane.f32.xlu0 %v1713
        %v1715 = vpop.xlane.xlu0 %1714
        %v1716 = vadd.f32 %v1697, %v1698
        %1717 = vadd.xlane.f32.xlu0 %v1716
        %v1718 = vpop.xlane.xlu0 %1717
        %v1719 = vadd.f32 %v1699, %v1700
        %1720 = vadd.xlane.f32.xlu0 %v1719
        %v1721 = vpop.xlane.xlu0 %1720
        %v1722 = vadd.f32 %v1701, %v1702
        %1723 = vadd.xlane.f32.xlu0 %v1722
        %v1724 = vpop.xlane.xlu0 %1723
        %v1725 = vadd.f32 %v1703, %v1704
        %1726 = vadd.xlane.f32.xlu0 %v1725
        %v1727 = vpop.xlane.xlu0 %1726
        %v1728 = vadd.f32 %v1705, %v1706
        %1729 = vadd.xlane.f32.xlu0 %v1728
        %v1730 = vpop.xlane.xlu0 %1729
        %v1731 = vadd.f32 %v1707, %v1708
        %1732 = vadd.xlane.f32.xlu0 %v1731
        %v1733 = vpop.xlane.xlu0 %1732
        %v1734 = vadd.f32 %v1709, %v1710
        %1735 = vadd.xlane.f32.xlu0 %v1734
        %v1736 = vpop.xlane.xlu0 %1735
        %v1737 = vrcp.pop 256.0
        %v1738 = vmul.f32 256.0, %v1737
        %v1739 = vsub.f32 1.0, %v1738
        %v1740 = vmul.f32 %v1737, %v1739
        %v1741 = vadd.f32 %v1737, %v1740
        %vm1742 = vweird.f32 %v1737
        %v1743 = vsel %vm1742, %v1737, %v1741
        %v1744 = vmul.f32 %v1715, %v1743
        %v1745 = vmul.f32 %v1718, %v1743
        %v1746 = vmul.f32 %v1721, %v1743
        %v1747 = vmul.f32 %v1724, %v1743
        %v1748 = vmul.f32 %v1727, %v1743
        %v1749 = vmul.f32 %v1730, %v1743
        %v1750 = vmul.f32 %v1733, %v1743
        %v1751 = vmul.f32 %v1736, %v1743
        %v1752 = vsub.f32 %v1695, %v1744
        %v1753 = vsub.f32 %v1696, %v1744
        %v1754 = vsub.f32 %v1697, %v1745
        %v1755 = vsub.f32 %v1698, %v1745
        %v1756 = vsub.f32 %v1699, %v1746
        %v1757 = vsub.f32 %v1700, %v1746
        %v1758 = vsub.f32 %v1701, %v1747
        %v1759 = vsub.f32 %v1702, %v1747
        %v1760 = vsub.f32 %v1703, %v1748
        %v1761 = vsub.f32 %v1704, %v1748
        %v1762 = vsub.f32 %v1705, %v1749
        %v1763 = vsub.f32 %v1706, %v1749
        %v1764 = vsub.f32 %v1707, %v1750
        %v1765 = vsub.f32 %v1708, %v1750
        %v1766 = vsub.f32 %v1709, %v1751
        %v1767 = vsub.f32 %v1710, %v1751
        %v1768 = vmul.f32 %v1752, %v1752
        %v1769 = vmul.f32 %v1753, %v1753
        %v1770 = vmul.f32 %v1754, %v1754
        %v1771 = vmul.f32 %v1755, %v1755
        %v1772 = vmul.f32 %v1756, %v1756
        %v1773 = vmul.f32 %v1757, %v1757
        %v1774 = vmul.f32 %v1758, %v1758
        %v1775 = vmul.f32 %v1759, %v1759
        %v1776 = vmul.f32 %v1760, %v1760
        %v1777 = vmul.f32 %v1761, %v1761
        %v1778 = vmul.f32 %v1762, %v1762
        %v1779 = vmul.f32 %v1763, %v1763
        %v1780 = vmul.f32 %v1764, %v1764
        %v1781 = vmul.f32 %v1765, %v1765
        %v1782 = vmul.f32 %v1766, %v1766
        %v1783 = vmul.f32 %v1767, %v1767
        %v1784 = vadd.f32 %v1768, %v1769
        %1785 = vadd.xlane.f32.xlu0 %v1784
        %v1786 = vpop.xlane.xlu0 %1785
        %v1787 = vadd.f32 %v1770, %v1771
        %1788 = vadd.xlane.f32.xlu0 %v1787
        %v1789 = vpop.xlane.xlu0 %1788
        %v1790 = vadd.f32 %v1772, %v1773
        %1791 = vadd.xlane.f32.xlu0 %v1790
        %v1792 = vpop.xlane.xlu0 %1791
        %v1793 = vadd.f32 %v1774, %v1775
        %1794 = vadd.xlane.f32.xlu0 %v1793
        %v1795 = vpop.xlane.xlu0 %1794
        %v1796 = vadd.f32 %v1776, %v1777
        %1797 = vadd.xlane.f32.xlu0 %v1796
        %v1798 = vpop.xlane.xlu0 %1797
        %v1799 = vadd.f32 %v1778, %v1779
        %1800 = vadd.xlane.f32.xlu0 %v1799
        %v1801 = vpop.xlane.xlu0 %1800
        %v1802 = vadd.f32 %v1780, %v1781
        %1803 = vadd.xlane.f32.xlu0 %v1802
        %v1804 = vpop.xlane.xlu0 %1803
        %v1805 = vadd.f32 %v1782, %v1783
        %1806 = vadd.xlane.f32.xlu0 %v1805
        %v1807 = vpop.xlane.xlu0 %1806
        %v1808 = vmul.f32 %v1786, %v1743
        %v1809 = vmul.f32 %v1789, %v1743
        %v1810 = vmul.f32 %v1792, %v1743
        %v1811 = vmul.f32 %v1795, %v1743
        %v1812 = vmul.f32 %v1798, %v1743
        %v1813 = vmul.f32 %v1801, %v1743
        %v1814 = vmul.f32 %v1804, %v1743
        %v1815 = vmul.f32 %v1807, %v1743
        %v1816 = vadd.f32 %v1808, 1e-05
        %v1817 = vadd.f32 %v1809, 1e-05
        %v1818 = vadd.f32 %v1810, 1e-05
        %v1819 = vadd.f32 %v1811, 1e-05
        %v1820 = vadd.f32 %v1812, 1e-05
        %v1821 = vadd.f32 %v1813, 1e-05
        %v1822 = vadd.f32 %v1814, 1e-05
        %v1823 = vadd.f32 %v1815, 1e-05
        %v1824 = vrsqrt.pop %v1816
        %v1825 = vmul.f32 %v1824, %v1816
        %v1826 = vmul.f32 %v1825, %v1824
        %v1827 = vmul.f32 0.5, %v1826
        %v1828 = vsub.f32 1.5, %v1827
        %v1829 = vmul.f32 %v1824, %v1828
        %vm1830 = vweird.f32 %v1816
        %vm1831 = vweird.f32 %v1824
        %vm1832 = vmor %vm1830, %vm1831
        %v1833 = vsel %vm1832, %v1824, %v1829
        %v1834 = vrsqrt.pop %v1817
        %v1835 = vmul.f32 %v1834, %v1817
        %v1836 = vmul.f32 %v1835, %v1834
        %v1837 = vmul.f32 0.5, %v1836
        %v1838 = vsub.f32 1.5, %v1837
        %v1839 = vmul.f32 %v1834, %v1838
        %vm1840 = vweird.f32 %v1817
        %vm1841 = vweird.f32 %v1834
        %vm1842 = vmor %vm1840, %vm1841
        %v1843 = vsel %vm1842, %v1834, %v1839
        %v1844 = vrsqrt.pop %v1818
        %v1845 = vmul.f32 %v1844, %v1818
        %v1846 = vmul.f32 %v1845, %v1844
        %v1847 = vmul.f32 0.5, %v1846
        %v1848 = vsub.f32 1.5, %v1847
        %v1849 = vmul.f32 %v1844, %v1848
        %vm1850 = vweird.f32 %v1818
        %vm1851 = vweird.f32 %v1844
        %vm1852 = vmor %vm1850, %vm1851
        %v1853 = vsel %vm1852, %v1844, %v1849
        %v1854 = vrsqrt.pop %v1819
        %v1855 = vmul.f32 %v1854, %v1819
        %v1856 = vmul.f32 %v1855, %v1854
        %v1857 = vmul.f32 0.5, %v1856
        %v1858 = vsub.f32 1.5, %v1857
        %v1859 = vmul.f32 %v1854, %v1858
        %vm1860 = vweird.f32 %v1819
        %vm1861 = vweird.f32 %v1854
        %vm1862 = vmor %vm1860, %vm1861
        %v1863 = vsel %vm1862, %v1854, %v1859
        %v1864 = vrsqrt.pop %v1820
        %v1865 = vmul.f32 %v1864, %v1820
        %v1866 = vmul.f32 %v1865, %v1864
        %v1867 = vmul.f32 0.5, %v1866
        %v1868 = vsub.f32 1.5, %v1867
        %v1869 = vmul.f32 %v1864, %v1868
        %vm1870 = vweird.f32 %v1820
        %vm1871 = vweird.f32 %v1864
        %vm1872 = vmor %vm1870, %vm1871
        %v1873 = vsel %vm1872, %v1864, %v1869
        %v1874 = vrsqrt.pop %v1821
        %v1875 = vmul.f32 %v1874, %v1821
        %v1876 = vmul.f32 %v1875, %v1874
        %v1877 = vmul.f32 0.5, %v1876
        %v1878 = vsub.f32 1.5, %v1877
        %v1879 = vmul.f32 %v1874, %v1878
        %vm1880 = vweird.f32 %v1821
        %vm1881 = vweird.f32 %v1874
        %vm1882 = vmor %vm1880, %vm1881
        %v1883 = vsel %vm1882, %v1874, %v1879
        %v1884 = vrsqrt.pop %v1822
        %v1885 = vmul.f32 %v1884, %v1822
        %v1886 = vmul.f32 %v1885, %v1884
        %v1887 = vmul.f32 0.5, %v1886
        %v1888 = vsub.f32 1.5, %v1887
        %v1889 = vmul.f32 %v1884, %v1888
        %vm1890 = vweird.f32 %v1822
        %vm1891 = vweird.f32 %v1884
        %vm1892 = vmor %vm1890, %vm1891
        %v1893 = vsel %vm1892, %v1884, %v1889
        %v1894 = vrsqrt.pop %v1823
        %v1895 = vmul.f32 %v1894, %v1823
        %v1896 = vmul.f32 %v1895, %v1894
        %v1897 = vmul.f32 0.5, %v1896
        %v1898 = vsub.f32 1.5, %v1897
        %v1899 = vmul.f32 %v1894, %v1898
        %vm1900 = vweird.f32 %v1823
        %vm1901 = vweird.f32 %v1894
        %vm1902 = vmor %vm1900, %vm1901
        %v1903 = vsel %vm1902, %v1894, %v1899
        %v1904 = vmul.f32 %v1752, %v1833
        %v1905 = vmul.f32 %v1753, %v1833
        %v1906 = vmul.f32 %v1754, %v1843
        %v1907 = vmul.f32 %v1755, %v1843
        %v1908 = vmul.f32 %v1756, %v1853
        %v1909 = vmul.f32 %v1757, %v1853
        %v1910 = vmul.f32 %v1758, %v1863
        %v1911 = vmul.f32 %v1759, %v1863
        %v1912 = vmul.f32 %v1760, %v1873
        %v1913 = vmul.f32 %v1761, %v1873
        %v1914 = vmul.f32 %v1762, %v1883
        %v1915 = vmul.f32 %v1763, %v1883
        %v1916 = vmul.f32 %v1764, %v1893
        %v1917 = vmul.f32 %v1765, %v1893
        %v1918 = vmul.f32 %v1766, %v1903
        %v1919 = vmul.f32 %v1767, %v1903
        %v1921 = vperm.slane %v1711, 0
        %v1922 = vperm.slane %v1711, 1
        %v1925 = vmul.f32 %v1904, %v1921
        %v1926 = vmul.f32 %v1905, %v1922
        %v1927 = vmul.f32 %v1906, %v1921
        %v1928 = vmul.f32 %v1907, %v1922
        %v1929 = vmul.f32 %v1908, %v1921
        %v1930 = vmul.f32 %v1909, %v1922
        %v1931 = vmul.f32 %v1910, %v1921
        %v1932 = vmul.f32 %v1911, %v1922
        %v1933 = vmul.f32 %v1912, %v1921
        %v1934 = vmul.f32 %v1913, %v1922
        %v1935 = vmul.f32 %v1914, %v1921
        %v1936 = vmul.f32 %v1915, %v1922
        %v1937 = vmul.f32 %v1916, %v1921
        %v1938 = vmul.f32 %v1917, %v1922
        %v1939 = vmul.f32 %v1918, %v1921
        %v1940 = vmul.f32 %v1919, %v1922
        %v1942 = vperm.slane %v1712, 0
        %v1943 = vperm.slane %v1712, 1
        %v1946 = vadd.f32 %v1925, %v1942
        %v1947 = vadd.f32 %v1926, %v1943
        %v1948 = vadd.f32 %v1927, %v1942
        %v1949 = vadd.f32 %v1928, %v1943
        %v1950 = vadd.f32 %v1929, %v1942
        %v1951 = vadd.f32 %v1930, %v1943
        %v1952 = vadd.f32 %v1931, %v1942
        %v1953 = vadd.f32 %v1932, %v1943
        %v1954 = vadd.f32 %v1933, %v1942
        %v1955 = vadd.f32 %v1934, %v1943
        %v1956 = vadd.f32 %v1935, %v1942
        %v1957 = vadd.f32 %v1936, %v1943
        %v1958 = vadd.f32 %v1937, %v1942
        %v1959 = vadd.f32 %v1938, %v1943
        %v1960 = vadd.f32 %v1939, %v1942
        %v1961 = vadd.f32 %v1940, %v1943
        %v1962 = vpack.c.bf16 %v1947, %v1946
        %v1963 = vpack.c.bf16 %v1949, %v1948
        %v1964 = vpack.c.bf16 %v1951, %v1950
        %v1965 = vpack.c.bf16 %v1953, %v1952
        %v1966 = vpack.c.bf16 %v1955, %v1954
        %v1967 = vpack.c.bf16 %v1957, %v1956
        %v1968 = vpack.c.bf16 %v1959, %v1958
        %v1969 = vpack.c.bf16 %v1961, %v1960
        %1970 = vst [vmem:[%s332] sm:$0xff] %v1962
        %1971 = vst [vmem:[%s332 + $0x8] sm:$0xff] %v1963
        %1972 = vst [vmem:[%s332 + $0x10] sm:$0xff] %v1964
        %1973 = vst [vmem:[%s332 + $0x18] sm:$0xff] %v1965
        %1974 = vst [vmem:[%s332 + $0x20] sm:$0xff] %v1966
        %1975 = vst [vmem:[%s332 + $0x28] sm:$0xff] %v1967
        %1976 = vst [vmem:[%s332 + $0x30] sm:$0xff] %v1968
        %1977 = vst [vmem:[%s332 + $0x38] sm:$0xff] %v1969
        %s1978 = sand.u32 %s185, 1
        %s1979 = scalar_lea.sflag [#allocation4], %s1978
        %s1980 = sand.u32 %s185, 1
        %s1981 = smul.addr %s1980, 64
        %s1982 = scalar_lea.vmem [#allocation8], %s1981
        // Predicated region
        $region61: #{positionwise_ffn.1} parent=47 // pred_check
          %p1983 = pneg %p195
        $region62: #{positionwise_ffn.1} parent=47 // pred_check_branch
          %1985 = sbr.rel (%p1983) target = $region64
        $region63: #{positionwise_ffn.1} parent=47 // pred_region
          %s1986 = smul.u32 8, %s25
          %1988 = vsyncadd %s1979, 0
          %s1989 = smul.addr %s1986, 2
          %s1990 = smul.addr %s1989, 4
          %s1991 = scalar_lea.hbm %s7, %s1990
          %s1992 = sshll.u32 %s1982, 4
          %s1993 = int_to_ptr.vmem [resolvable:$true] %s1992
          %s1994 = sshll.u32 %s1991, 4
          %s1995 = int_to_ptr.hbm [resolvable:$true] %s1994
          %2000 = dma.vmem_to_hbm [thread:$0]  %s1993, 1024, %s1995, %s1979, 128, 128, 8
        $region64: #{positionwise_ffn.1} parent=47 // pred_fallthru
          _
      $region48: #{positionwise_ffn.1} parent=5 // pred_fallthru
        _
      %p2001 = scmp.le.s32.totalorder 2, %s20
      // Predicated region
      $region65: #{positionwise_ffn.1} parent=5 // pred_check
        %p2002 = pneg %p2001
      $region66: #{positionwise_ffn.1} parent=5 // pred_check_branch
        %2004 = sbr.rel (%p2002) target = $region68
      $region67: #{positionwise_ffn.1} parent=5 // pred_region
        %s2005 = ssub.s32 %s20, 2
        // Predicated region
        $region69: #{positionwise_ffn.1} parent=67 // pred_check
          %p2006 = pneg %p201
        $region70: #{positionwise_ffn.1} parent=67 // pred_check_branch
          %2008 = sbr.rel (%p2006) target = $region72
        $region71: #{positionwise_ffn.1} parent=67 // pred_region
          %s2009 = sand.u32 %s186, 1
          %s2010 = scalar_lea.sflag [#allocation4], %s2009
          %s2011 = sand.u32 %s186, 1
          %s2012 = smul.addr %s2011, 64
          %s2013 = scalar_lea.vmem [#allocation8], %s2012
          %2015 = dma.done %s2010, 1024
        $region72: #{positionwise_ffn.1} parent=67 // pred_fallthru
          _
      $region68: #{positionwise_ffn.1} parent=5 // pred_fallthru
        _
    $region6: #{positionwise_ffn.1} parent=1 // loop_footer
      %s24 = sadd.s32 1, %s20
    $region7: #{positionwise_ffn.1} parent=1 // loop_footer_branch
      %19 = sbr.rel target = $region3
    $region8: #{positionwise_ffn.1} parent=1 // loop_exit
      _
    %2016 = vsyncpa [#allocation3], 1
    %s2017 = scalar_lea.sflag [#allocation3], 1
    %2018 = vsyncpa %s2017, 1
    %2019 = vsyncpa [#allocation6], 1
    %2020 = vsyncpa [#allocation4], 1
    %s2021 = scalar_lea.sflag [#allocation4], 1
    %2022 = vsyncpa %s2021, 1

</llo_original>
